<compile_context>
chip_gen: v5e
topology: v5e:2x2
jax: 0.10.0
libtpu: 0.0.40
codegen_flags: <defaults>
</compile_context>

<pallas_src>
import jax
import jax.numpy as jnp
from jax import lax
from jax.experimental import pallas as pl
from jax.experimental.pallas import tpu as pltpu


# ----------------------------- kernel helpers ------------------------------

def _leaky_relu(x, slope=0.01):
    return jnp.where(x >= 0, x, slope * x)


def _softplus(x):
    # numerically stable softplus: max(x,0) + log1p(exp(-|x|))
    return jnp.maximum(x, 0.0) + jnp.log1p(jnp.exp(-jnp.abs(x)))


def _linear(x, w_ref, b_ref):
    # w_ref: [in, out] (pre-transposed), b_ref: [1, out]
    return jnp.dot(x, w_ref[...], preferred_element_type=jnp.float32) + b_ref[...]


# -------------------------------- kernel -----------------------------------

def _build_kernel(*, n_keys, key_tile, out_dim, use_bf16):
    """Returns the Pallas kernel body (closes over static config)."""
    D = out_dim
    cdt = jnp.bfloat16 if use_bf16 else jnp.float32
    ragged_keys = (n_keys % key_tile) != 0

    def kernel(vec_ref, ptsdn_q_ref, dist_ref,
               kca_ref, vca_ref, kda_ref, vda_ref,
               ca_qw, ca_qb, da_qw, da_qb,
               fc1_w, fc1_b, fc2_w, fc2_b, fc3_w, fc3_b,
               db1_wa, db1_wd, db1_b, db2_w, db2_b, db3_w, db3_b,
               ol1_wx, ol1_wd, ol1_b, ol2_w8, ol2_b,
               out_ref, disp_ref,
               qca_s, qda_s, mca_s, mda_s, acc_ca_s, acc_da_s):
        kstep = pl.program_id(1)

        # ---- per-row-tile init: q projections + online-softmax state -------
        @pl.when(kstep == 0)
        def _():
            qca_s[...] = _linear(vec_ref[...], ca_qw, ca_qb)       # scale folded
            qda_s[...] = _linear(ptsdn_q_ref[...], da_qw, da_qb)
            mca_s[...] = jnp.full_like(mca_s, -jnp.inf)
            mda_s[...] = jnp.full_like(mda_s, -jnp.inf)
            acc_ca_s[...] = jnp.zeros_like(acc_ca_s)
            acc_da_s[...] = jnp.zeros_like(acc_da_s)

        # ---- one online-softmax step over this key block --------------------
        def flash_step(q_s, k_ref, vaug_ref, m_s, acc_s):
            # scores on the MXU in bf16, f32 accumulate; no explicit k.T
            s = lax.dot_general(q_s[...].astype(cdt), k_ref[...].astype(cdt),
                                (((1,), (1,)), ((), ())),
                                preferred_element_type=jnp.float32)   # [tn, tk]
            if ragged_keys:
                kid = kstep * key_tile + lax.broadcasted_iota(jnp.int32, s.shape, 1)
                s = jnp.where(kid < n_keys, s, -jnp.inf)
            m_prev = m_s[...]
            m_new = jnp.maximum(m_prev, jnp.max(s, axis=-1, keepdims=True))
            p = jnp.exp(s - m_new)
            # V carries a trailing ones column, so the softmax denominator is
            # accumulated inside the same MXU pass (acc[:, D]).
            acc_s[...] = (jnp.exp(m_prev - m_new) * acc_s[...]
                          + jnp.dot(p.astype(cdt), vaug_ref[...].astype(cdt),
                                    preferred_element_type=jnp.float32))
            m_s[...] = m_new

        flash_step(qca_s, kca_ref, vca_ref, mca_s, acc_ca_s)   # cross_attn
        flash_step(qda_s, kda_ref, vda_ref, mda_s, acc_da_s)   # denoise_attn

        # ---- finalize + MLP heads on the last key block ----------------------
        @pl.when(kstep == pl.num_programs(1) - 1)
        def _():
            def finish(acc_s):
                acc = acc_s[...]
                # normalize after p@v; reciprocal on the EUP slot
                return acc[:, :D] * pl.reciprocal(acc[:, D:D + 1], approx=True)

            dist = dist_ref[...]                                   # [tn, 128]

            x = _leaky_relu(finish(acc_ca_s))
            x = _leaky_relu(_linear(x, fc1_w, fc1_b))
            x = _leaky_relu(_linear(x, fc2_w, fc2_b))
            x = _leaky_relu(_linear(x, fc3_w, fc3_b))

            d = finish(acc_da_s)
            # concat([d, dist]) @ W  ==  d @ W[:D] + dist @ W[D:]  (pre-split,
            # zero-padded to 256 lanes in the wrapper; padding is exact).
            h = _leaky_relu(
                jnp.dot(d, db1_wa[...], preferred_element_type=jnp.float32)
                + jnp.dot(dist, db1_wd[...], preferred_element_type=jnp.float32)
                + db1_b[...])
            h = _leaky_relu(_linear(h, db2_w, db2_b))
            disp_ref[...] = _linear(h, db3_w, db3_b)               # [tn, 128]

            g = _leaky_relu(
                jnp.dot(x, ol1_wx[...], preferred_element_type=jnp.float32)
                + jnp.dot(dist, ol1_wd[...], preferred_element_type=jnp.float32)
                + ol1_b[...])                                      # [tn, 256]

            # Final 256 -> 1 projection produced lane-major: contract the last
            # dims of the (8-row zero-padded) weight slab and g -> [8, tn],
            # keep row 0.  Output stores are lane-dense and only N*4 HBM bytes.
            r = lax.dot_general(ol2_w8[...], g, (((1,), (1,)), ((), ())),
                                preferred_element_type=jnp.float32)[0:1, :]
            r = r + ol2_b[...]                                     # [1, tn]
            out_ref[...] = _softplus(r).reshape(out_ref.shape)

    return kernel


# ----------------------- wrapper-side param preparation ----------------------

def _prepare_weights(raw_params, out_dim):
    """Trace-time transforms: scale folding, concat splitting, 128-lane padding."""
    (ca_qw, ca_qb, ca_kw, ca_kb, ca_vw, ca_vb,
     da_qw, da_qb, da_kw, da_kb, da_vw, da_vb,
     fc1_w, fc1_b, fc2_w, fc2_b, fc3_w, fc3_b,
     db1_w, db1_b, db2_w, db2_b, db3_w, db3_b,
     ol1_w, ol1_b, ol2_w, ol2_b) = raw_params

    scale = 1.0 / (out_dim ** 0.5)
    hid = out_dim + 128                               # 160
    hid_pad = ((hid + 127) // 128) * 128              # 256

    def pad_cols(w, n):
        return jnp.pad(w, ((0, 0), (0, n - w.shape[1])))

    def pad_rows(w, n):
        return jnp.pad(w, ((0, n - w.shape[0]), (0, 0)))

    # Split concat-Linear weights: rows 0:out_dim act on the attention branch,
    # rows out_dim: act on `distance`.  Zero-pad 160-wide dims to 256 lanes.
    db1_wa = pad_cols(db1_w[:out_dim, :], hid_pad)          # [D, 256]
    db1_wd = pad_cols(db1_w[out_dim:, :], hid_pad)          # [128, 256]
    db1_bp = pad_cols(db1_b, hid_pad)                       # [1, 256]
    db2_wp = pad_cols(pad_rows(db2_w, hid_pad), hid_pad)    # [256, 256]
    db2_bp = pad_cols(db2_b, hid_pad)                       # [1, 256]
    db3_wp = pad_rows(db3_w, hid_pad)                       # [256, 128]

    ol1_wx = pad_cols(ol1_w[:out_dim, :], hid_pad)          # [D, 256]
    ol1_wd = pad_cols(ol1_w[out_dim:, :], hid_pad)          # [128, 256]
    ol1_bp = pad_cols(ol1_b, hid_pad)                       # [1, 256]
    ol2_w8 = pad_rows(pad_cols(ol2_w.T, hid_pad), 8)        # [8, 256], row 0 real

    attn_q = (ca_qw * scale, ca_qb * scale, da_qw * scale, da_qb * scale)
    kv_proj = (ca_kw, ca_kb, ca_vw, ca_vb, da_kw, da_kb, da_vw, da_vb)
    mlp = (fc1_w, fc1_b, fc2_w, fc2_b, fc3_w, fc3_b,
           db1_wa, db1_wd, db1_bp, db2_wp, db2_bp, db3_wp, db3_b,
           ol1_wx, ol1_wd, ol1_bp, ol2_w8, ol2_b)
    return attn_q, kv_proj, mlp


def _padded_rows(x, rows):
    pad = rows - x.shape[0]
    if pad == 0:
        return x
    return jnp.pad(x, ((0, pad), (0, 0)))


def _select_tiling():
    """Generation-dependent row tile / VMEM limit (v7x only has 64 MiB VMEM)."""
    vmem_cap = None
    try:
        vmem_cap = getattr(pltpu.get_tpu_info(), "vmem_capacity_bytes", None)
    except Exception:
        vmem_cap = None
    if vmem_cap is not None and vmem_cap >= 100 * 1024 * 1024:
        return 512, 96 * 1024 * 1024      # v5e / v6e: 128 MiB physical VMEM
    return 256, 48 * 1024 * 1024          # v7x (64 MiB) or unknown: conservative


# -------------------------------- wrapper -----------------------------------

def feature_attn_layer(pts, vec, pts_dn, dist, raw_params, out_dim, *,
                       tile_n=None, key_tile=512, use_bf16=True):
    n = pts.shape[0]
    D = out_dim

    default_tn, vmem_limit = _select_tiling()
    tn = min(tile_n if tile_n is not None else default_tn, n)   # query-row tile
    tk = min(key_tile, n)                                       # key tile

    num_row_tiles = pl.cdiv(n, tn)
    n_rows_pad = num_row_tiles * tn
    num_key_tiles = pl.cdiv(n, tk)
    n_keys_pad = num_key_tiles * tk

    attn_q, kv_proj, mlp = _prepare_weights(raw_params, out_dim)
    ca_kw, ca_kb, ca_vw, ca_vb, da_kw, da_kb, da_vw, da_vb = kv_proj

    # ---- hoisted, grid-invariant K / V projections (plain XLA matmuls) ----
    kv_dt = jnp.bfloat16 if use_bf16 else jnp.float32
    ones_col = jnp.ones((n, 1), jnp.float32)

    def make_kv(src, kw, kb, vw, vb):
        k = src @ kw + kb
        v = jnp.concatenate([src @ vw + vb, ones_col], axis=1)   # fused denom col
        # pad keys with zero rows (masked to -inf scores in-kernel)
        return (_padded_rows(k, n_keys_pad).astype(kv_dt),
                _padded_rows(v, n_keys_pad).astype(kv_dt))

    k_ca, vaug_ca = make_kv(pts, ca_kw, ca_kb, ca_vw, ca_vb)
    k_da, vaug_da = make_kv(pts_dn, da_kw, da_kb, da_vw, da_vb)

    # query-side arrays padded to a row-tile multiple (no OOB block reads)
    vec_p = _padded_rows(vec, n_rows_pad)
    ptsdn_p = _padded_rows(pts_dn, n_rows_pad)
    dist_p = _padded_rows(dist, n_rows_pad)

    kernel = _build_kernel(n_keys=n, key_tile=tk, out_dim=D, use_bf16=use_bf16)

    def rows(feat):                      # row-tiled (constant across key axis)
        return pl.BlockSpec((tn, feat), lambda i, k: (i, 0))

    def keys(feat):                      # key-tiled (constant across row axis)
        return pl.BlockSpec((tk, feat), lambda i, k: (k, 0))

    def full(arr):                       # resident weights
        return pl.BlockSpec(arr.shape, lambda i, k: (0, 0))

    weights = list(attn_q) + list(mlp)
    in_specs = ([rows(vec.shape[1]), rows(pts_dn.shape[1]), rows(dist.shape[1]),
                 keys(D), keys(D + 1), keys(D), keys(D + 1)]
                + [full(w) for w in weights])
    out_specs = (pl.BlockSpec((1, 1, tn), lambda i, k: (i, 0, 0)),   # lane-major out
                 pl.BlockSpec((tn, 128), lambda i, k: (i, 0)))        # displacement

    out_lanes, disp_pad = pl.pallas_call(
        kernel,
        grid=(num_row_tiles, num_key_tiles),
        in_specs=in_specs,
        out_specs=out_specs,
        out_shape=(jax.ShapeDtypeStruct((num_row_tiles, 1, tn), jnp.float32),
                   jax.ShapeDtypeStruct((n_rows_pad, 128), jnp.float32)),
        scratch_shapes=[pltpu.VMEM((tn, D), jnp.float32),      # q (cross_attn)
                        pltpu.VMEM((tn, D), jnp.float32),      # q (denoise_attn)
                        pltpu.VMEM((tn, 1), jnp.float32),      # m (cross_attn)
                        pltpu.VMEM((tn, 1), jnp.float32),      # m (denoise_attn)
                        pltpu.VMEM((tn, D + 1), jnp.float32),  # acc+denom (cross)
                        pltpu.VMEM((tn, D + 1), jnp.float32)], # acc+denom (denoise)
        compiler_params=pltpu.CompilerParams(
            dimension_semantics=("parallel", "arbitrary"),
            vmem_limit_bytes=vmem_limit),
    )(vec_p, ptsdn_p, dist_p, k_ca, vaug_ca, k_da, vaug_da, *weights)

    out = out_lanes.reshape(n_rows_pad, 1)[:n]    # lane j of tile i == row i*tn+j
    disp = disp_pad[:n]
    return out, disp


# ----------------------------- param helpers --------------------------------

def init_linear(key, in_dim, out_dim):
    """Deterministic torch-like init; returns (W^T [in,out], b [1,out])."""
    kw, kb = jax.random.split(key)
    bound = 1.0 / (in_dim ** 0.5)
    w = jax.random.uniform(kw, (in_dim, out_dim), jnp.float32, -bound, bound)
    b = jax.random.uniform(kb, (1, out_dim), jnp.float32, -bound, bound)
    return w, b


def make_params(key, pts_dim, vec_dim, out_dim):
    od128 = out_dim + 128
    specs = [
        (vec_dim, out_dim), (pts_dim, out_dim), (pts_dim, out_dim),   # cross_attn q,k,v
        (pts_dim, out_dim), (pts_dim, out_dim), (pts_dim, out_dim),   # denoise_attn q,k,v
        (out_dim, out_dim), (out_dim, out_dim), (out_dim, out_dim),   # FC 1..3
        (od128, od128), (od128, od128), (od128, 128),                 # denoise_block 1..3
        (od128, od128), (od128, 1),                                   # output_layer 1..2
    ]
    keys = jax.random.split(key, len(specs))
    params = []
    for k, (i, o) in zip(keys, specs):
        w, b = init_linear(k, i, o)
        params.extend([w, b])
    return params


# ------------------------------ JAX reference --------------------------------

def ref_forward(pts, vec, pts_dn, dist, params, out_dim):
    (ca_qw, ca_qb, ca_kw, ca_kb, ca_vw, ca_vb,
     da_qw, da_qb, da_kw, da_kb, da_vw, da_vb,
     fc1_w, fc1_b, fc2_w, fc2_b, fc3_w, fc3_b,
     db1_w, db1_b, db2_w, db2_b, db3_w, db3_b,
     ol1_w, ol1_b, ol2_w, ol2_b) = params

    def lin(x, w, b):
        return x @ w + b

    def lrelu(x):
        return jnp.where(x >= 0, x, 0.01 * x)

    def attn(p, v_, qw, qb, kw, kb, vw, vb):
        q = lin(v_, qw, qb)
        k = lin(p, kw, kb)
        v = lin(p, vw, vb)
        s = q @ k.T / out_dim ** 0.5
        a = jax.nn.softmax(s, axis=-1)
        return a @ v

    x = lrelu(attn(pts, vec, ca_qw, ca_qb, ca_kw, ca_kb, ca_vw, ca_vb))
    x = lrelu(lin(x, fc1_w, fc1_b))
    x = lrelu(lin(x, fc2_w, fc2_b))
    x = lrelu(lin(x, fc3_w, fc3_b))

    d = attn(pts_dn, pts_dn, da_qw, da_qb, da_kw, da_kb, da_vw, da_vb)
    d = jnp.concatenate([d, dist], axis=1)
    d = lrelu(lin(d, db1_w, db1_b))
    d = lrelu(lin(d, db2_w, db2_b))
    displacement = lin(d, db3_w, db3_b)

    x = jnp.concatenate([x, dist], axis=1)
    x = lrelu(lin(x, ol1_w, ol1_b))
    out = jax.nn.softplus(lin(x, ol2_w, ol2_b))
    return out, displacement


# --------------------------------- main --------------------------------------

if __name__ == "__main__":
    key = jax.random.PRNGKey(0)
    N, pts_dim, vec_dim, out_dim = 16, 8, 8, 32

    k_pts, k_vec, k_dn, k_dist, k_par = jax.random.split(key, 5)
    pts = jax.random.normal(k_pts, (N, pts_dim), jnp.float32)
    vec = jax.random.normal(k_vec, (N, vec_dim), jnp.float32)
    pts_dn = jax.random.normal(k_dn, (N, pts_dim), jnp.float32)
    distance = jax.random.normal(k_dist, (N, 128), jnp.float32)

    params = make_params(k_par, pts_dim, vec_dim, out_dim)

    out, displacement = feature_attn_layer(pts, vec, pts_dn, distance, params, out_dim)
    jax.block_until_ready((out, displacement))

    out_ref, disp_ref = ref_forward(pts, vec, pts_dn, distance, params, out_dim)
    assert out.shape == (N, 1) and displacement.shape == (N, 128)
    # Tolerance covers the bf16 MXU operands on the attention matmuls
    # (~2^-8 relative per element; expected drift well under 1%) plus the
    # approx-reciprocal softmax normalization; everything else stays f32.
    assert jnp.allclose(out, out_ref, rtol=3e-2, atol=3e-2), (
        float(jnp.max(jnp.abs(out - out_ref))))
    assert jnp.allclose(displacement, disp_ref, rtol=3e-2, atol=3e-2), (
        float(jnp.max(jnp.abs(displacement - disp_ref))))

    print("KERNEL_OK")
</pallas_src>

<mosaic_0001>
module attributes {stable_mosaic.version = 11 : i64} {
  func.func @kernel(%arg0: i32, %arg1: i32, %arg2: memref<16x8xf32, #tpu.memory_space<vmem>>, %arg3: memref<16x8xf32, #tpu.memory_space<vmem>>, %arg4: memref<16x128xf32, #tpu.memory_space<vmem>>, %arg5: memref<16x32xbf16, #tpu.memory_space<vmem>>, %arg6: memref<16x33xbf16, #tpu.memory_space<vmem>>, %arg7: memref<16x32xbf16, #tpu.memory_space<vmem>>, %arg8: memref<16x33xbf16, #tpu.memory_space<vmem>>, %arg9: memref<8x32xf32, #tpu.memory_space<vmem>>, %arg10: memref<1x32xf32, #tpu.memory_space<vmem>>, %arg11: memref<8x32xf32, #tpu.memory_space<vmem>>, %arg12: memref<1x32xf32, #tpu.memory_space<vmem>>, %arg13: memref<32x32xf32, #tpu.memory_space<vmem>>, %arg14: memref<1x32xf32, #tpu.memory_space<vmem>>, %arg15: memref<32x32xf32, #tpu.memory_space<vmem>>, %arg16: memref<1x32xf32, #tpu.memory_space<vmem>>, %arg17: memref<32x32xf32, #tpu.memory_space<vmem>>, %arg18: memref<1x32xf32, #tpu.memory_space<vmem>>, %arg19: memref<32x256xf32, #tpu.memory_space<vmem>>, %arg20: memref<128x256xf32, #tpu.memory_space<vmem>>, %arg21: memref<1x256xf32, #tpu.memory_space<vmem>>, %arg22: memref<256x256xf32, #tpu.memory_space<vmem>>, %arg23: memref<1x256xf32, #tpu.memory_space<vmem>>, %arg24: memref<256x128xf32, #tpu.memory_space<vmem>>, %arg25: memref<1x128xf32, #tpu.memory_space<vmem>>, %arg26: memref<32x256xf32, #tpu.memory_space<vmem>>, %arg27: memref<128x256xf32, #tpu.memory_space<vmem>>, %arg28: memref<1x256xf32, #tpu.memory_space<vmem>>, %arg29: memref<8x256xf32, #tpu.memory_space<vmem>>, %arg30: memref<1x1xf32, #tpu.memory_space<vmem>>, %arg31: memref<1x1x16xf32, #tpu.memory_space<vmem>>, %arg32: memref<16x128xf32, #tpu.memory_space<vmem>>, %arg33: memref<16x32xf32, #tpu.memory_space<vmem>>, %arg34: memref<16x32xf32, #tpu.memory_space<vmem>>, %arg35: memref<16x1xf32, #tpu.memory_space<vmem>>, %arg36: memref<16x1xf32, #tpu.memory_space<vmem>>, %arg37: memref<16x33xf32, #tpu.memory_space<vmem>>, %arg38: memref<16x33xf32, #tpu.memory_space<vmem>>) attributes {dimension_semantics = [#tpu.dimension_semantics<parallel>, #tpu.dimension_semantics<arbitrary>], iteration_bounds = array<i64: 1, 1>, scalar_prefetch = 0 : i64, scratch_operands = 6 : i64, tpu.core_type = #tpu.core_type<tc>, window_params = [{transform_indices = @transform_0, window_bounds = array<i64: 16, 8>}, {transform_indices = @transform_1, window_bounds = array<i64: 16, 8>}, {transform_indices = @transform_2, window_bounds = array<i64: 16, 128>}, {transform_indices = @transform_3, window_bounds = array<i64: 16, 32>}, {transform_indices = @transform_4, window_bounds = array<i64: 16, 33>}, {transform_indices = @transform_5, window_bounds = array<i64: 16, 32>}, {transform_indices = @transform_6, window_bounds = array<i64: 16, 33>}, {pipeline_mode = #tpu.pipeline_mode<synchronous>, transform_indices = @transform_7, window_bounds = array<i64: 8, 32>}, {pipeline_mode = #tpu.pipeline_mode<synchronous>, transform_indices = @transform_8, window_bounds = array<i64: 1, 32>}, {pipeline_mode = #tpu.pipeline_mode<synchronous>, transform_indices = @transform_9, window_bounds = array<i64: 8, 32>}, {pipeline_mode = #tpu.pipeline_mode<synchronous>, transform_indices = @transform_10, window_bounds = array<i64: 1, 32>}, {pipeline_mode = #tpu.pipeline_mode<synchronous>, transform_indices = @transform_11, window_bounds = array<i64: 32, 32>}, {pipeline_mode = #tpu.pipeline_mode<synchronous>, transform_indices = @transform_12, window_bounds = array<i64: 1, 32>}, {pipeline_mode = #tpu.pipeline_mode<synchronous>, transform_indices = @transform_13, window_bounds = array<i64: 32, 32>}, {pipeline_mode = #tpu.pipeline_mode<synchronous>, transform_indices = @transform_14, window_bounds = array<i64: 1, 32>}, {pipeline_mode = #tpu.pipeline_mode<synchronous>, transform_indices = @transform_15, window_bounds = array<i64: 32, 32>}, {pipeline_mode = #tpu.pipeline_mode<synchronous>, transform_indices = @transform_16, window_bounds = array<i64: 1, 32>}, {pipeline_mode = #tpu.pipeline_mode<synchronous>, transform_indices = @transform_17, window_bounds = array<i64: 32, 256>}, {pipeline_mode = #tpu.pipeline_mode<synchronous>, transform_indices = @transform_18, window_bounds = array<i64: 128, 256>}, {pipeline_mode = #tpu.pipeline_mode<synchronous>, transform_indices = @transform_19, window_bounds = array<i64: 1, 256>}, {pipeline_mode = #tpu.pipeline_mode<synchronous>, transform_indices = @transform_20, window_bounds = array<i64: 256, 256>}, {pipeline_mode = #tpu.pipeline_mode<synchronous>, transform_indices = @transform_21, window_bounds = array<i64: 1, 256>}, {pipeline_mode = #tpu.pipeline_mode<synchronous>, transform_indices = @transform_22, window_bounds = array<i64: 256, 128>}, {pipeline_mode = #tpu.pipeline_mode<synchronous>, transform_indices = @transform_23, window_bounds = array<i64: 1, 128>}, {pipeline_mode = #tpu.pipeline_mode<synchronous>, transform_indices = @transform_24, window_bounds = array<i64: 32, 256>}, {pipeline_mode = #tpu.pipeline_mode<synchronous>, transform_indices = @transform_25, window_bounds = array<i64: 128, 256>}, {pipeline_mode = #tpu.pipeline_mode<synchronous>, transform_indices = @transform_26, window_bounds = array<i64: 1, 256>}, {pipeline_mode = #tpu.pipeline_mode<synchronous>, transform_indices = @transform_27, window_bounds = array<i64: 8, 256>}, {pipeline_mode = #tpu.pipeline_mode<synchronous>, transform_indices = @transform_28, window_bounds = array<i64: 1, 1>}, {transform_indices = @transform_29, window_bounds = array<i64: 1, 1, 16>}, {transform_indices = @transform_30, window_bounds = array<i64: 16, 128>}]} {
    %c0_i32 = arith.constant 0 : i32
    %0 = arith.cmpi eq, %arg1, %c0_i32 : i32
    %1 = arith.extui %0 : i1 to i32
    %c0_i32_0 = arith.constant 0 : i32
    %2 = arith.cmpi ne, %1, %c0_i32_0 : i32
    scf.if %2 {
      %c0_35 = arith.constant 0 : index
      %c0_36 = arith.constant 0 : index
      %50 = vector.load %arg2[%c0_35, %c0_36] : memref<16x8xf32, #tpu.memory_space<vmem>>, vector<16x8xf32>
      %c0_37 = arith.constant 0 : index
      %c0_38 = arith.constant 0 : index
      %51 = vector.load %arg9[%c0_37, %c0_38] : memref<8x32xf32, #tpu.memory_space<vmem>>, vector<8x32xf32>
      %cst_39 = arith.constant dense<0.000000e+00> : vector<16x32xf32>
      %52 = tpu.matmul %50, %51, %cst_39 {dimension_numbers = #tpu.dot_dimension_numbers<[1], [0], [0], [1], [0, 0, 1, 1], [], []>} : vector<16x8xf32>, vector<8x32xf32>, vector<16x32xf32> -> vector<16x32xf32>
      %c0_40 = arith.constant 0 : index
      %c0_41 = arith.constant 0 : index
      %53 = vector.load %arg10[%c0_40, %c0_41] : memref<1x32xf32, #tpu.memory_space<vmem>>, vector<1x32xf32>
      %54 = vector.broadcast %53 : vector<1x32xf32> to vector<16x32xf32>
      %55 = arith.addf %52, %54 : vector<16x32xf32>
      %c0_42 = arith.constant 0 : index
      %c0_43 = arith.constant 0 : index
      %56 = vector.load %arg33[%c0_42, %c0_43] : memref<16x32xf32, #tpu.memory_space<vmem>>, vector<16x32xf32>
      tpu.vector_store %arg33[%c0_42, %c0_43], %55 {strides = array<i32>} : memref<16x32xf32, #tpu.memory_space<vmem>>, vector<16x32xf32>,
      %c0_44 = arith.constant 0 : index
      %c0_45 = arith.constant 0 : index
      %57 = vector.load %arg3[%c0_44, %c0_45] : memref<16x8xf32, #tpu.memory_space<vmem>>, vector<16x8xf32>
      %c0_46 = arith.constant 0 : index
      %c0_47 = arith.constant 0 : index
      %58 = vector.load %arg11[%c0_46, %c0_47] : memref<8x32xf32, #tpu.memory_space<vmem>>, vector<8x32xf32>
      %cst_48 = arith.constant dense<0.000000e+00> : vector<16x32xf32>
      %59 = tpu.matmul %57, %58, %cst_48 {dimension_numbers = #tpu.dot_dimension_numbers<[1], [0], [0], [1], [0, 0, 1, 1], [], []>} : vector<16x8xf32>, vector<8x32xf32>, vector<16x32xf32> -> vector<16x32xf32>
      %c0_49 = arith.constant 0 : index
      %c0_50 = arith.constant 0 : index
      %60 = vector.load %arg12[%c0_49, %c0_50] : memref<1x32xf32, #tpu.memory_space<vmem>>, vector<1x32xf32>
      %61 = vector.broadcast %60 : vector<1x32xf32> to vector<16x32xf32>
      %62 = arith.addf %59, %61 : vector<16x32xf32>
      %c0_51 = arith.constant 0 : index
      %c0_52 = arith.constant 0 : index
      %63 = vector.load %arg34[%c0_51, %c0_52] : memref<16x32xf32, #tpu.memory_space<vmem>>, vector<16x32xf32>
      tpu.vector_store %arg34[%c0_51, %c0_52], %62 {strides = array<i32>} : memref<16x32xf32, #tpu.memory_space<vmem>>, vector<16x32xf32>,
      %cst_53 = arith.constant 0xFF800000 : f32
      %64 = vector.broadcast %cst_53 : f32 to vector<16x1xf32>
      %c0_54 = arith.constant 0 : index
      %c0_55 = arith.constant 0 : index
      %65 = vector.load %arg35[%c0_54, %c0_55] : memref<16x1xf32, #tpu.memory_space<vmem>>, vector<16x1xf32>
      tpu.vector_store %arg35[%c0_54, %c0_55], %64 {strides = array<i32>} : memref<16x1xf32, #tpu.memory_space<vmem>>, vector<16x1xf32>,
      %cst_56 = arith.constant 0xFF800000 : f32
      %66 = vector.broadcast %cst_56 : f32 to vector<16x1xf32>
      %c0_57 = arith.constant 0 : index
      %c0_58 = arith.constant 0 : index
      %67 = vector.load %arg36[%c0_57, %c0_58] : memref<16x1xf32, #tpu.memory_space<vmem>>, vector<16x1xf32>
      tpu.vector_store %arg36[%c0_57, %c0_58], %66 {strides = array<i32>} : memref<16x1xf32, #tpu.memory_space<vmem>>, vector<16x1xf32>,
      %cst_59 = arith.constant 0.000000e+00 : f32
      %68 = vector.broadcast %cst_59 : f32 to vector<16x33xf32>
      %c0_60 = arith.constant 0 : index
      %c0_61 = arith.constant 0 : index
      %69 = vector.load %arg37[%c0_60, %c0_61] : memref<16x33xf32, #tpu.memory_space<vmem>>, vector<16x33xf32>
      tpu.vector_store %arg37[%c0_60, %c0_61], %68 {strides = array<i32>} : memref<16x33xf32, #tpu.memory_space<vmem>>, vector<16x33xf32>,
      %cst_62 = arith.constant 0.000000e+00 : f32
      %70 = vector.broadcast %cst_62 : f32 to vector<16x33xf32>
      %c0_63 = arith.constant 0 : index
      %c0_64 = arith.constant 0 : index
      %71 = vector.load %arg38[%c0_63, %c0_64] : memref<16x33xf32, #tpu.memory_space<vmem>>, vector<16x33xf32>
      tpu.vector_store %arg38[%c0_63, %c0_64], %70 {strides = array<i32>} : memref<16x33xf32, #tpu.memory_space<vmem>>, vector<16x33xf32>,
    } else {
    }
    %c0 = arith.constant 0 : index
    %c0_1 = arith.constant 0 : index
    %3 = vector.load %arg33[%c0, %c0_1] : memref<16x32xf32, #tpu.memory_space<vmem>>, vector<16x32xf32>
    %4 = arith.truncf %3 : vector<16x32xf32> to vector<16x32xbf16>
    %c0_2 = arith.constant 0 : index
    %c0_3 = arith.constant 0 : index
    %5 = vector.load %arg5[%c0_2, %c0_3] : memref<16x32xbf16, #tpu.memory_space<vmem>>, vector<16x32xbf16>
    %cst = arith.constant dense<0.000000e+00> : vector<16x16xf32>
    %6 = tpu.matmul %4, %5, %cst {dimension_numbers = #tpu.dot_dimension_numbers<[1], [1], [0], [0], [0, 0, 1, 0], [], []>} : vector<16x32xbf16>, vector<16x32xbf16>, vector<16x16xf32> -> vector<16x16xf32>
    %c0_4 = arith.constant 0 : index
    %c0_5 = arith.constant 0 : index
    %7 = vector.load %arg35[%c0_4, %c0_5] : memref<16x1xf32, #tpu.memory_space<vmem>>, vector<16x1xf32>
    %cst_6 = arith.constant dense<0xFF800000> : vector<16xf32>
    %8 = vector.multi_reduction <maximumf>, %6, %cst_6 [1] : vector<16x16xf32> to vector<16xf32>
    %9 = vector.shape_cast %8 : vector<16xf32> to vector<16x1xf32>
    %10 = arith.maximumf %7, %9 : vector<16x1xf32>
    %11 = vector.broadcast %10 : vector<16x1xf32> to vector<16x16xf32>
    %12 = arith.subf %6, %11 : vector<16x16xf32>
    %13 = math.exp %12 : vector<16x16xf32>
    %14 = arith.subf %7, %10 : vector<16x1xf32>
    %15 = math.exp %14 : vector<16x1xf32>
    %c0_7 = arith.constant 0 : index
    %c0_8 = arith.constant 0 : index
    %16 = vector.load %arg37[%c0_7, %c0_8] : memref<16x33xf32, #tpu.memory_space<vmem>>, vector<16x33xf32>
    %17 = vector.broadcast %15 : vector<16x1xf32> to vector<16x33xf32>
    %18 = arith.mulf %17, %16 : vector<16x33xf32>
    %19 = arith.truncf %13 : vector<16x16xf32> to vector<16x16xbf16>
    %c0_9 = arith.constant 0 : index
    %c0_10 = arith.constant 0 : index
    %20 = vector.load %arg6[%c0_9, %c0_10] : memref<16x33xbf16, #tpu.memory_space<vmem>>, vector<16x33xbf16>
    %cst_11 = arith.constant dense<0.000000e+00> : vector<16x33xf32>
    %21 = tpu.matmul %19, %20, %cst_11 {dimension_numbers = #tpu.dot_dimension_numbers<[1], [0], [0], [1], [0, 0, 1, 1], [], []>} : vector<16x16xbf16>, vector<16x33xbf16>, vector<16x33xf32> -> vector<16x33xf32>
    %22 = arith.addf %18, %21 : vector<16x33xf32>
    %c0_12 = arith.constant 0 : index
    %c0_13 = arith.constant 0 : index
    %23 = vector.load %arg37[%c0_12, %c0_13] : memref<16x33xf32, #tpu.memory_space<vmem>>, vector<16x33xf32>
    tpu.vector_store %arg37[%c0_12, %c0_13], %22 {strides = array<i32>} : memref<16x33xf32, #tpu.memory_space<vmem>>, vector<16x33xf32>,
    %c0_14 = arith.constant 0 : index
    %c0_15 = arith.constant 0 : index
    %24 = vector.load %arg35[%c0_14, %c0_15] : memref<16x1xf32, #tpu.memory_space<vmem>>, vector<16x1xf32>
    tpu.vector_store %arg35[%c0_14, %c0_15], %10 {strides = array<i32>} : memref<16x1xf32, #tpu.memory_space<vmem>>, vector<16x1xf32>,
    %c0_16 = arith.constant 0 : index
    %c0_17 = arith.constant 0 : index
    %25 = vector.load %arg34[%c0_16, %c0_17] : memref<16x32xf32, #tpu.memory_space<vmem>>, vector<16x32xf32>
    %26 = arith.truncf %25 : vector<16x32xf32> to vector<16x32xbf16>
    %c0_18 = arith.constant 0 : index
    %c0_19 = arith.constant 0 : index
    %27 = vector.load %arg7[%c0_18, %c0_19] : memref<16x32xbf16, #tpu.memory_space<vmem>>, vector<16x32xbf16>
    %cst_20 = arith.constant dense<0.000000e+00> : vector<16x16xf32>
    %28 = tpu.matmul %26, %27, %cst_20 {dimension_numbers = #tpu.dot_dimension_numbers<[1], [1], [0], [0], [0, 0, 1, 0], [], []>} : vector<16x32xbf16>, vector<16x32xbf16>, vector<16x16xf32> -> vector<16x16xf32>
    %c0_21 = arith.constant 0 : index
    %c0_22 = arith.constant 0 : index
    %29 = vector.load %arg36[%c0_21, %c0_22] : memref<16x1xf32, #tpu.memory_space<vmem>>, vector<16x1xf32>
    %cst_23 = arith.constant dense<0xFF800000> : vector<16xf32>
    %30 = vector.multi_reduction <maximumf>, %28, %cst_23 [1] : vector<16x16xf32> to vector<16xf32>
    %31 = vector.shape_cast %30 : vector<16xf32> to vector<16x1xf32>
    %32 = arith.maximumf %29, %31 : vector<16x1xf32>
    %33 = vector.broadcast %32 : vector<16x1xf32> to vector<16x16xf32>
    %34 = arith.subf %28, %33 : vector<16x16xf32>
    %35 = math.exp %34 : vector<16x16xf32>
    %36 = arith.subf %29, %32 : vector<16x1xf32>
    %37 = math.exp %36 : vector<16x1xf32>
    %c0_24 = arith.constant 0 : index
    %c0_25 = arith.constant 0 : index
    %38 = vector.load %arg38[%c0_24, %c0_25] : memref<16x33xf32, #tpu.memory_space<vmem>>, vector<16x33xf32>
    %39 = vector.broadcast %37 : vector<16x1xf32> to vector<16x33xf32>
    %40 = arith.mulf %39, %38 : vector<16x33xf32>
    %41 = arith.truncf %35 : vector<16x16xf32> to vector<16x16xbf16>
    %c0_26 = arith.constant 0 : index
    %c0_27 = arith.constant 0 : index
    %42 = vector.load %arg8[%c0_26, %c0_27] : memref<16x33xbf16, #tpu.memory_space<vmem>>, vector<16x33xbf16>
    %cst_28 = arith.constant dense<0.000000e+00> : vector<16x33xf32>
    %43 = tpu.matmul %41, %42, %cst_28 {dimension_numbers = #tpu.dot_dimension_numbers<[1], [0], [0], [1], [0, 0, 1, 1], [], []>} : vector<16x16xbf16>, vector<16x33xbf16>, vector<16x33xf32> -> vector<16x33xf32>
    %44 = arith.addf %40, %43 : vector<16x33xf32>
    %c0_29 = arith.constant 0 : index
    %c0_30 = arith.constant 0 : index
    %45 = vector.load %arg38[%c0_29, %c0_30] : memref<16x33xf32, #tpu.memory_space<vmem>>, vector<16x33xf32>
    tpu.vector_store %arg38[%c0_29, %c0_30], %44 {strides = array<i32>} : memref<16x33xf32, #tpu.memory_space<vmem>>, vector<16x33xf32>,
    %c0_31 = arith.constant 0 : index
    %c0_32 = arith.constant 0 : index
    %46 = vector.load %arg36[%c0_31, %c0_32] : memref<16x1xf32, #tpu.memory_space<vmem>>, vector<16x1xf32>
    tpu.vector_store %arg36[%c0_31, %c0_32], %32 {strides = array<i32>} : memref<16x1xf32, #tpu.memory_space<vmem>>, vector<16x1xf32>,
    %c0_i32_33 = arith.constant 0 : i32
    %47 = arith.cmpi eq, %arg1, %c0_i32_33 : i32
    %48 = arith.extui %47 : i1 to i32
    %c0_i32_34 = arith.constant 0 : i32
    %49 = arith.cmpi ne, %48, %c0_i32_34 : i32
    scf.if %49 {
      %c0_35 = arith.constant 0 : index
      %c0_36 = arith.constant 0 : index
      %50 = vector.load %arg4[%c0_35, %c0_36] : memref<16x128xf32, #tpu.memory_space<vmem>>, vector<16x128xf32>
      %c0_37 = arith.constant 0 : index
      %c0_38 = arith.constant 0 : index
      %51 = vector.load %arg37[%c0_37, %c0_38] : memref<16x33xf32, #tpu.memory_space<vmem>>, vector<16x33xf32>
      %52 = vector.extract_strided_slice %51 {offsets = [0, 0], sizes = [16, 32], strides = [1, 1]} : vector<16x33xf32> to vector<16x32xf32>
      %53 = vector.extract_strided_slice %51 {offsets = [0, 32], sizes = [16, 1], strides = [1, 1]} : vector<16x33xf32> to vector<16x1xf32>
      %54 = tpu.reciprocal %53 {approx = true} : vector<16x1xf32> -> vector<16x1xf32>
      %55 = vector.broadcast %54 : vector<16x1xf32> to vector<16x32xf32>
      %56 = arith.mulf %52, %55 : vector<16x32xf32>
      %cst_39 = arith.constant 0.000000e+00 : f32
      %57 = vector.broadcast %cst_39 : f32 to vector<16x32xf32>
      %58 = arith.cmpf oge, %56, %57 : vector<16x32xf32>
      %cst_40 = arith.constant 0.00999999977 : f32
      %59 = vector.broadcast %cst_40 : f32 to vector<16x32xf32>
      %60 = arith.mulf %59, %56 : vector<16x32xf32>
      %61 = arith.select %58, %56, %60 : vector<16x32xi1>, vector<16x32xf32>
      %c0_41 = arith.constant 0 : index
      %c0_42 = arith.constant 0 : index
      %62 = vector.load %arg13[%c0_41, %c0_42] : memref<32x32xf32, #tpu.memory_space<vmem>>, vector<32x32xf32>
      %cst_43 = arith.constant dense<0.000000e+00> : vector<16x32xf32>
      %63 = tpu.matmul %61, %62, %cst_43 {dimension_numbers = #tpu.dot_dimension_numbers<[1], [0], [0], [1], [0, 0, 1, 1], [], []>} : vector<16x32xf32>, vector<32x32xf32>, vector<16x32xf32> -> vector<16x32xf32>
      %c0_44 = arith.constant 0 : index
      %c0_45 = arith.constant 0 : index
      %64 = vector.load %arg14[%c0_44, %c0_45] : memref<1x32xf32, #tpu.memory_space<vmem>>, vector<1x32xf32>
      %65 = vector.broadcast %64 : vector<1x32xf32> to vector<16x32xf32>
      %66 = arith.addf %63, %65 : vector<16x32xf32>
      %cst_46 = arith.constant 0.000000e+00 : f32
      %67 = vector.broadcast %cst_46 : f32 to vector<16x32xf32>
      %68 = arith.cmpf oge, %66, %67 : vector<16x32xf32>
      %cst_47 = arith.constant 0.00999999977 : f32
      %69 = vector.broadcast %cst_47 : f32 to vector<16x32xf32>
      %70 = arith.mulf %69, %66 : vector<16x32xf32>
      %71 = arith.select %68, %66, %70 : vector<16x32xi1>, vector<16x32xf32>
      %c0_48 = arith.constant 0 : index
      %c0_49 = arith.constant 0 : index
      %72 = vector.load %arg15[%c0_48, %c0_49] : memref<32x32xf32, #tpu.memory_space<vmem>>, vector<32x32xf32>
      %cst_50 = arith.constant dense<0.000000e+00> : vector<16x32xf32>
      %73 = tpu.matmul %71, %72, %cst_50 {dimension_numbers = #tpu.dot_dimension_numbers<[1], [0], [0], [1], [0, 0, 1, 1], [], []>} : vector<16x32xf32>, vector<32x32xf32>, vector<16x32xf32> -> vector<16x32xf32>
      %c0_51 = arith.constant 0 : index
      %c0_52 = arith.constant 0 : index
      %74 = vector.load %arg16[%c0_51, %c0_52] : memref<1x32xf32, #tpu.memory_space<vmem>>, vector<1x32xf32>
      %75 = vector.broadcast %74 : vector<1x32xf32> to vector<16x32xf32>
      %76 = arith.addf %73, %75 : vector<16x32xf32>
      %cst_53 = arith.constant 0.000000e+00 : f32
      %77 = vector.broadcast %cst_53 : f32 to vector<16x32xf32>
      %78 = arith.cmpf oge, %76, %77 : vector<16x32xf32>
      %cst_54 = arith.constant 0.00999999977 : f32
      %79 = vector.broadcast %cst_54 : f32 to vector<16x32xf32>
      %80 = arith.mulf %79, %76 : vector<16x32xf32>
      %81 = arith.select %78, %76, %80 : vector<16x32xi1>, vector<16x32xf32>
      %c0_55 = arith.constant 0 : index
      %c0_56 = arith.constant 0 : index
      %82 = vector.load %arg17[%c0_55, %c0_56] : memref<32x32xf32, #tpu.memory_space<vmem>>, vector<32x32xf32>
      %cst_57 = arith.constant dense<0.000000e+00> : vector<16x32xf32>
      %83 = tpu.matmul %81, %82, %cst_57 {dimension_numbers = #tpu.dot_dimension_numbers<[1], [0], [0], [1], [0, 0, 1, 1], [], []>} : vector<16x32xf32>, vector<32x32xf32>, vector<16x32xf32> -> vector<16x32xf32>
      %c0_58 = arith.constant 0 : index
      %c0_59 = arith.constant 0 : index
      %84 = vector.load %arg18[%c0_58, %c0_59] : memref<1x32xf32, #tpu.memory_space<vmem>>, vector<1x32xf32>
      %85 = vector.broadcast %84 : vector<1x32xf32> to vector<16x32xf32>
      %86 = arith.addf %83, %85 : vector<16x32xf32>
      %cst_60 = arith.constant 0.000000e+00 : f32
      %87 = vector.broadcast %cst_60 : f32 to vector<16x32xf32>
      %88 = arith.cmpf oge, %86, %87 : vector<16x32xf32>
      %cst_61 = arith.constant 0.00999999977 : f32
      %89 = vector.broadcast %cst_61 : f32 to vector<16x32xf32>
      %90 = arith.mulf %89, %86 : vector<16x32xf32>
      %91 = arith.select %88, %86, %90 : vector<16x32xi1>, vector<16x32xf32>
      %c0_62 = arith.constant 0 : index
      %c0_63 = arith.constant 0 : index
      %92 = vector.load %arg38[%c0_62, %c0_63] : memref<16x33xf32, #tpu.memory_space<vmem>>, vector<16x33xf32>
      %93 = vector.extract_strided_slice %92 {offsets = [0, 0], sizes = [16, 32], strides = [1, 1]} : vector<16x33xf32> to vector<16x32xf32>
      %94 = vector.extract_strided_slice %92 {offsets = [0, 32], sizes = [16, 1], strides = [1, 1]} : vector<16x33xf32> to vector<16x1xf32>
      %95 = tpu.reciprocal %94 {approx = true} : vector<16x1xf32> -> vector<16x1xf32>
      %96 = vector.broadcast %95 : vector<16x1xf32> to vector<16x32xf32>
      %97 = arith.mulf %93, %96 : vector<16x32xf32>
      %c0_64 = arith.constant 0 : index
      %c0_65 = arith.constant 0 : index
      %98 = vector.load %arg19[%c0_64, %c0_65] : memref<32x256xf32, #tpu.memory_space<vmem>>, vector<32x256xf32>
      %cst_66 = arith.constant dense<0.000000e+00> : vector<16x256xf32>
      %99 = tpu.matmul %97, %98, %cst_66 {dimension_numbers = #tpu.dot_dimension_numbers<[1], [0], [0], [1], [0, 0, 1, 1], [], []>} : vector<16x32xf32>, vector<32x256xf32>, vector<16x256xf32> -> vector<16x256xf32>
      %c0_67 = arith.constant 0 : index
      %c0_68 = arith.constant 0 : index
      %100 = vector.load %arg20[%c0_67, %c0_68] : memref<128x256xf32, #tpu.memory_space<vmem>>, vector<128x256xf32>
      %cst_69 = arith.constant dense<0.000000e+00> : vector<16x256xf32>
      %101 = tpu.matmul %50, %100, %cst_69 {dimension_numbers = #tpu.dot_dimension_numbers<[1], [0], [0], [1], [0, 0, 1, 1], [], []>} : vector<16x128xf32>, vector<128x256xf32>, vector<16x256xf32> -> vector<16x256xf32>
      %102 = arith.addf %99, %101 : vector<16x256xf32>
      %c0_70 = arith.constant 0 : index
      %c0_71 = arith.constant 0 : index
      %103 = vector.load %arg21[%c0_70, %c0_71] : memref<1x256xf32, #tpu.memory_space<vmem>>, vector<1x256xf32>
      %104 = vector.broadcast %103 : vector<1x256xf32> to vector<16x256xf32>
      %105 = arith.addf %102, %104 : vector<16x256xf32>
      %cst_72 = arith.constant 0.000000e+00 : f32
      %106 = vector.broadcast %cst_72 : f32 to vector<16x256xf32>
      %107 = arith.cmpf oge, %105, %106 : vector<16x256xf32>
      %cst_73 = arith.constant 0.00999999977 : f32
      %108 = vector.broadcast %cst_73 : f32 to vector<16x256xf32>
      %109 = arith.mulf %108, %105 : vector<16x256xf32>
      %110 = arith.select %107, %105, %109 : vector<16x256xi1>, vector<16x256xf32>
      %c0_74 = arith.constant 0 : index
      %c0_75 = arith.constant 0 : index
      %111 = vector.load %arg22[%c0_74, %c0_75] : memref<256x256xf32, #tpu.memory_space<vmem>>, vector<256x256xf32>
      %cst_76 = arith.constant dense<0.000000e+00> : vector<16x256xf32>
      %112 = tpu.matmul %110, %111, %cst_76 {dimension_numbers = #tpu.dot_dimension_numbers<[1], [0], [0], [1], [0, 0, 1, 1], [], []>} : vector<16x256xf32>, vector<256x256xf32>, vector<16x256xf32> -> vector<16x256xf32>
      %c0_77 = arith.constant 0 : index
      %c0_78 = arith.constant 0 : index
      %113 = vector.load %arg23[%c0_77, %c0_78] : memref<1x256xf32, #tpu.memory_space<vmem>>, vector<1x256xf32>
      %114 = vector.broadcast %113 : vector<1x256xf32> to vector<16x256xf32>
      %115 = arith.addf %112, %114 : vector<16x256xf32>
      %cst_79 = arith.constant 0.000000e+00 : f32
      %116 = vector.broadcast %cst_79 : f32 to vector<16x256xf32>
      %117 = arith.cmpf oge, %115, %116 : vector<16x256xf32>
      %cst_80 = arith.constant 0.00999999977 : f32
      %118 = vector.broadcast %cst_80 : f32 to vector<16x256xf32>
      %119 = arith.mulf %118, %115 : vector<16x256xf32>
      %120 = arith.select %117, %115, %119 : vector<16x256xi1>, vector<16x256xf32>
      %c0_81 = arith.constant 0 : index
      %c0_82 = arith.constant 0 : index
      %121 = vector.load %arg24[%c0_81, %c0_82] : memref<256x128xf32, #tpu.memory_space<vmem>>, vector<256x128xf32>
      %cst_83 = arith.constant dense<0.000000e+00> : vector<16x128xf32>
      %122 = tpu.matmul %120, %121, %cst_83 {dimension_numbers = #tpu.dot_dimension_numbers<[1], [0], [0], [1], [0, 0, 1, 1], [], []>} : vector<16x256xf32>, vector<256x128xf32>, vector<16x128xf32> -> vector<16x128xf32>
      %c0_84 = arith.constant 0 : index
      %c0_85 = arith.constant 0 : index
      %123 = vector.load %arg25[%c0_84, %c0_85] : memref<1x128xf32, #tpu.memory_space<vmem>>, vector<1x128xf32>
      %124 = vector.broadcast %123 : vector<1x128xf32> to vector<16x128xf32>
      %125 = arith.addf %122, %124 : vector<16x128xf32>
      %c0_86 = arith.constant 0 : index
      %c0_87 = arith.constant 0 : index
      %126 = vector.load %arg32[%c0_86, %c0_87] : memref<16x128xf32, #tpu.memory_space<vmem>>, vector<16x128xf32>
      tpu.vector_store %arg32[%c0_86, %c0_87], %125 {strides = array<i32>} : memref<16x128xf32, #tpu.memory_space<vmem>>, vector<16x128xf32>,
      %c0_88 = arith.constant 0 : index
      %c0_89 = arith.constant 0 : index
      %127 = vector.load %arg26[%c0_88, %c0_89] : memref<32x256xf32, #tpu.memory_space<vmem>>, vector<32x256xf32>
      %cst_90 = arith.constant dense<0.000000e+00> : vector<16x256xf32>
      %128 = tpu.matmul %91, %127, %cst_90 {dimension_numbers = #tpu.dot_dimension_numbers<[1], [0], [0], [1], [0, 0, 1, 1], [], []>} : vector<16x32xf32>, vector<32x256xf32>, vector<16x256xf32> -> vector<16x256xf32>
      %c0_91 = arith.constant 0 : index
      %c0_92 = arith.constant 0 : index
      %129 = vector.load %arg27[%c0_91, %c0_92] : memref<128x256xf32, #tpu.memory_space<vmem>>, vector<128x256xf32>
      %cst_93 = arith.constant dense<0.000000e+00> : vector<16x256xf32>
      %130 = tpu.matmul %50, %129, %cst_93 {dimension_numbers = #tpu.dot_dimension_numbers<[1], [0], [0], [1], [0, 0, 1, 1], [], []>} : vector<16x128xf32>, vector<128x256xf32>, vector<16x256xf32> -> vector<16x256xf32>
      %131 = arith.addf %128, %130 : vector<16x256xf32>
      %c0_94 = arith.constant 0 : index
      %c0_95 = arith.constant 0 : index
      %132 = vector.load %arg28[%c0_94, %c0_95] : memref<1x256xf32, #tpu.memory_space<vmem>>, vector<1x256xf32>
      %133 = vector.broadcast %132 : vector<1x256xf32> to vector<16x256xf32>
      %134 = arith.addf %131, %133 : vector<16x256xf32>
      %cst_96 = arith.constant 0.000000e+00 : f32
      %135 = vector.broadcast %cst_96 : f32 to vector<16x256xf32>
      %136 = arith.cmpf oge, %134, %135 : vector<16x256xf32>
      %cst_97 = arith.constant 0.00999999977 : f32
      %137 = vector.broadcast %cst_97 : f32 to vector<16x256xf32>
      %138 = arith.mulf %137, %134 : vector<16x256xf32>
      %139 = arith.select %136, %134, %138 : vector<16x256xi1>, vector<16x256xf32>
      %c0_98 = arith.constant 0 : index
      %c0_99 = arith.constant 0 : index
      %140 = vector.load %arg29[%c0_98, %c0_99] : memref<8x256xf32, #tpu.memory_space<vmem>>, vector<8x256xf32>
      %cst_100 = arith.constant dense<0.000000e+00> : vector<8x16xf32>
      %141 = tpu.matmul %140, %139, %cst_100 {dimension_numbers = #tpu.dot_dimension_numbers<[1], [1], [0], [0], [0, 0, 1, 0], [], []>} : vector<8x256xf32>, vector<16x256xf32>, vector<8x16xf32> -> vector<8x16xf32>
      %142 = vector.extract_strided_slice %141 {offsets = [0, 0], sizes = [1, 16], strides = [1, 1]} : vector<8x16xf32> to vector<1x16xf32>
      %c0_101 = arith.constant 0 : index
      %c0_102 = arith.constant 0 : index
      %143 = vector.load %arg30[%c0_101, %c0_102] : memref<1x1xf32, #tpu.memory_space<vmem>>, vector<1x1xf32>
      %144 = vector.broadcast %143 : vector<1x1xf32> to vector<1x16xf32>
      %145 = arith.addf %142, %144 : vector<1x16xf32>
      %cst_103 = arith.constant 0.000000e+00 : f32
      %146 = vector.broadcast %cst_103 : f32 to vector<1x16xf32>
      %147 = arith.maximumf %145, %146 : vector<1x16xf32>
      %148 = math.absf %145 : vector<1x16xf32>
      %cst_104 = arith.constant 0.000000e+00 : f32
      %149 = vector.broadcast %cst_104 : f32 to vector<1x16xf32>
      %150 = arith.subf %149, %148 : vector<1x16xf32>
      %151 = math.exp %150 : vector<1x16xf32>
      %152 = math.log1p %151 : vector<1x16xf32>
      %153 = arith.addf %147, %152 : vector<1x16xf32>
      %154 = vector.shape_cast %153 : vector<1x16xf32> to vector<1x1x16xf32>
      %c0_105 = arith.constant 0 : index
      %c0_106 = arith.constant 0 : index
      %c0_107 = arith.constant 0 : index
      %155 = vector.load %arg31[%c0_105, %c0_106, %c0_107] : memref<1x1x16xf32, #tpu.memory_space<vmem>>, vector<1x1x16xf32>
      tpu.vector_store %arg31[%c0_105, %c0_106, %c0_107], %154 {strides = array<i32>} : memref<1x1x16xf32, #tpu.memory_space<vmem>>, vector<1x1x16xf32>,
    } else {
    }
    return
  }
  func.func @transform_0(%arg0: i32, %arg1: i32) -> (i32, i32) {
    %c0_i32 = arith.constant 0 : i32
    %c0_i32_0 = arith.constant 0 : i32
    return %arg0, %c0_i32 : i32, i32
  }
  func.func @transform_1(%arg0: i32, %arg1: i32) -> (i32, i32) {
    %c0_i32 = arith.constant 0 : i32
    %c0_i32_0 = arith.constant 0 : i32
    return %arg0, %c0_i32 : i32, i32
  }
  func.func @transform_2(%arg0: i32, %arg1: i32) -> (i32, i32) {
    %c0_i32 = arith.constant 0 : i32
    %c0_i32_0 = arith.constant 0 : i32
    return %arg0, %c0_i32 : i32, i32
  }
  func.func @transform_3(%arg0: i32, %arg1: i32) -> (i32, i32) {
    %c0_i32 = arith.constant 0 : i32
    %c0_i32_0 = arith.constant 0 : i32
    return %arg1, %c0_i32 : i32, i32
  }
  func.func @transform_4(%arg0: i32, %arg1: i32) -> (i32, i32) {
    %c0_i32 = arith.constant 0 : i32
    %c0_i32_0 = arith.constant 0 : i32
    return %arg1, %c0_i32 : i32, i32
  }
  func.func @transform_5(%arg0: i32, %arg1: i32) -> (i32, i32) {
    %c0_i32 = arith.constant 0 : i32
    %c0_i32_0 = arith.constant 0 : i32
    return %arg1, %c0_i32 : i32, i32
  }
  func.func @transform_6(%arg0: i32, %arg1: i32) -> (i32, i32) {
    %c0_i32 = arith.constant 0 : i32
    %c0_i32_0 = arith.constant 0 : i32
    return %arg1, %c0_i32 : i32, i32
  }
  func.func @transform_7(%arg0: i32, %arg1: i32) -> (i32, i32) {
    %c0_i32 = arith.constant 0 : i32
    %c0_i32_0 = arith.constant 0 : i32
    %c0_i32_1 = arith.constant 0 : i32
    return %c0_i32, %c0_i32_0 : i32, i32
  }
  func.func @transform_8(%arg0: i32, %arg1: i32) -> (i32, i32) {
    %c0_i32 = arith.constant 0 : i32
    %c0_i32_0 = arith.constant 0 : i32
    %c0_i32_1 = arith.constant 0 : i32
    return %c0_i32, %c0_i32_0 : i32, i32
  }
  func.func @transform_9(%arg0: i32, %arg1: i32) -> (i32, i32) {
    %c0_i32 = arith.constant 0 : i32
    %c0_i32_0 = arith.constant 0 : i32
    %c0_i32_1 = arith.constant 0 : i32
    return %c0_i32, %c0_i32_0 : i32, i32
  }
  func.func @transform_10(%arg0: i32, %arg1: i32) -> (i32, i32) {
    %c0_i32 = arith.constant 0 : i32
    %c0_i32_0 = arith.constant 0 : i32
    %c0_i32_1 = arith.constant 0 : i32
    return %c0_i32, %c0_i32_0 : i32, i32
  }
  func.func @transform_11(%arg0: i32, %arg1: i32) -> (i32, i32) {
    %c0_i32 = arith.constant 0 : i32
    %c0_i32_0 = arith.constant 0 : i32
    %c0_i32_1 = arith.constant 0 : i32
    return %c0_i32, %c0_i32_0 : i32, i32
  }
  func.func @transform_12(%arg0: i32, %arg1: i32) -> (i32, i32) {
    %c0_i32 = arith.constant 0 : i32
    %c0_i32_0 = arith.constant 0 : i32
    %c0_i32_1 = arith.constant 0 : i32
    return %c0_i32, %c0_i32_0 : i32, i32
  }
  func.func @transform_13(%arg0: i32, %arg1: i32) -> (i32, i32) {
    %c0_i32 = arith.constant 0 : i32
    %c0_i32_0 = arith.constant 0 : i32
    %c0_i32_1 = arith.constant 0 : i32
    return %c0_i32, %c0_i32_0 : i32, i32
  }
  func.func @transform_14(%arg0: i32, %arg1: i32) -> (i32, i32) {
    %c0_i32 = arith.constant 0 : i32
    %c0_i32_0 = arith.constant 0 : i32
    %c0_i32_1 = arith.constant 0 : i32
    return %c0_i32, %c0_i32_0 : i32, i32
  }
  func.func @transform_15(%arg0: i32, %arg1: i32) -> (i32, i32) {
    %c0_i32 = arith.constant 0 : i32
    %c0_i32_0 = arith.constant 0 : i32
    %c0_i32_1 = arith.constant 0 : i32
    return %c0_i32, %c0_i32_0 : i32, i32
  }
  func.func @transform_16(%arg0: i32, %arg1: i32) -> (i32, i32) {
    %c0_i32 = arith.constant 0 : i32
    %c0_i32_0 = arith.constant 0 : i32
    %c0_i32_1 = arith.constant 0 : i32
    return %c0_i32, %c0_i32_0 : i32, i32
  }
  func.func @transform_17(%arg0: i32, %arg1: i32) -> (i32, i32) {
    %c0_i32 = arith.constant 0 : i32
    %c0_i32_0 = arith.constant 0 : i32
    %c0_i32_1 = arith.constant 0 : i32
    return %c0_i32, %c0_i32_0 : i32, i32
  }
  func.func @transform_18(%arg0: i32, %arg1: i32) -> (i32, i32) {
    %c0_i32 = arith.constant 0 : i32
    %c0_i32_0 = arith.constant 0 : i32
    %c0_i32_1 = arith.constant 0 : i32
    return %c0_i32, %c0_i32_0 : i32, i32
  }
  func.func @transform_19(%arg0: i32, %arg1: i32) -> (i32, i32) {
    %c0_i32 = arith.constant 0 : i32
    %c0_i32_0 = arith.constant 0 : i32
    %c0_i32_1 = arith.constant 0 : i32
    return %c0_i32, %c0_i32_0 : i32, i32
  }
  func.func @transform_20(%arg0: i32, %arg1: i32) -> (i32, i32) {
    %c0_i32 = arith.constant 0 : i32
    %c0_i32_0 = arith.constant 0 : i32
    %c0_i32_1 = arith.constant 0 : i32
    return %c0_i32, %c0_i32_0 : i32, i32
  }
  func.func @transform_21(%arg0: i32, %arg1: i32) -> (i32, i32) {
    %c0_i32 = arith.constant 0 : i32
    %c0_i32_0 = arith.constant 0 : i32
    %c0_i32_1 = arith.constant 0 : i32
    return %c0_i32, %c0_i32_0 : i32, i32
  }
  func.func @transform_22(%arg0: i32, %arg1: i32) -> (i32, i32) {
    %c0_i32 = arith.constant 0 : i32
    %c0_i32_0 = arith.constant 0 : i32
    %c0_i32_1 = arith.constant 0 : i32
    return %c0_i32, %c0_i32_0 : i32, i32
  }
  func.func @transform_23(%arg0: i32, %arg1: i32) -> (i32, i32) {
    %c0_i32 = arith.constant 0 : i32
    %c0_i32_0 = arith.constant 0 : i32
    %c0_i32_1 = arith.constant 0 : i32
    return %c0_i32, %c0_i32_0 : i32, i32
  }
  func.func @transform_24(%arg0: i32, %arg1: i32) -> (i32, i32) {
    %c0_i32 = arith.constant 0 : i32
    %c0_i32_0 = arith.constant 0 : i32
    %c0_i32_1 = arith.constant 0 : i32
    return %c0_i32, %c0_i32_0 : i32, i32
  }
  func.func @transform_25(%arg0: i32, %arg1: i32) -> (i32, i32) {
    %c0_i32 = arith.constant 0 : i32
    %c0_i32_0 = arith.constant 0 : i32
    %c0_i32_1 = arith.constant 0 : i32
    return %c0_i32, %c0_i32_0 : i32, i32
  }
  func.func @transform_26(%arg0: i32, %arg1: i32) -> (i32, i32) {
    %c0_i32 = arith.constant 0 : i32
    %c0_i32_0 = arith.constant 0 : i32
    %c0_i32_1 = arith.constant 0 : i32
    return %c0_i32, %c0_i32_0 : i32, i32
  }
  func.func @transform_27(%arg0: i32, %arg1: i32) -> (i32, i32) {
    %c0_i32 = arith.constant 0 : i32
    %c0_i32_0 = arith.constant 0 : i32
    %c0_i32_1 = arith.constant 0 : i32
    return %c0_i32, %c0_i32_0 : i32, i32
  }
  func.func @transform_28(%arg0: i32, %arg1: i32) -> (i32, i32) {
    %c0_i32 = arith.constant 0 : i32
    %c0_i32_0 = arith.constant 0 : i32
    %c0_i32_1 = arith.constant 0 : i32
    return %c0_i32, %c0_i32_0 : i32, i32
  }
  func.func @transform_29(%arg0: i32, %arg1: i32) -> (i32, i32, i32) {
    %c0_i32 = arith.constant 0 : i32
    %c0_i32_0 = arith.constant 0 : i32
    %c0_i32_1 = arith.constant 0 : i32
    return %arg0, %c0_i32, %c0_i32_0 : i32, i32, i32
  }
  func.func @transform_30(%arg0: i32, %arg1: i32) -> (i32, i32) {
    %c0_i32 = arith.constant 0 : i32
    %c0_i32_0 = arith.constant 0 : i32
    return %arg0, %c0_i32 : i32, i32
  }
}

</mosaic_0001>

<llo_original>
// kernel: tpu_custom_call.1
$region0: #{tpu_custom_call.1}
  #allocation0 [shape = 'u32[]', space=smem, size = 0x4, offset = 0x4, fixed_abs, tag = 'smem constant byte address 0x4 - core index']
  #allocation1 [shape = 'u32[72,128]{1,0:T(1,128)}', space=vmem, size = 0x9000, scoped, tag = 'internal scratch']
  #allocation2 [shape = 'f32[16,32]{1,0:T(8,128)}', space=vmem, size = 0x2000, scoped, tag = 'scratch operand']
  #allocation3 [shape = 'f32[16,32]{1,0:T(8,128)}', space=vmem, size = 0x2000, scoped, tag = 'scratch operand']
  #allocation4 [shape = 'f32[16,1]{1,0:T(8,128)}', space=vmem, size = 0x2000, scoped, tag = 'scratch operand']
  #allocation5 [shape = 'f32[16,1]{1,0:T(8,128)}', space=vmem, size = 0x2000, scoped, tag = 'scratch operand']
  #allocation6 [shape = 'f32[16,33]{1,0:T(8,128)}', space=vmem, size = 0x2000, scoped, tag = 'scratch operand']
  #allocation7 [shape = 'f32[16,33]{1,0:T(8,128)}', space=vmem, size = 0x2000, scoped, tag = 'scratch operand']
  #allocation8 [shape = 'f32[1,1]{1,0:T(1,128)S(1)}', space=vmem, size = 0x200, scoped, tag = 'scoped memory for tpu_custom_call.1']
  %s0 = inlined_call_operand.smem [shape: u32[31], index: -1, kind: input, shape index: {}]
  %s1 = sld [smem:[%s0]]
  %s2 = scalar_lea.smem %s0, 1
  %s3 = sld [smem:[%s2]]
  %s4 = scalar_lea.smem %s0, 2
  %s5 = sld [smem:[%s4]]
  %s6 = scalar_lea.smem %s0, 3
  %s7 = sld [smem:[%s6]]
  %s8 = scalar_lea.smem %s0, 4
  %s9 = sld [smem:[%s8]]
  %s10 = scalar_lea.smem %s0, 5
  %s11 = sld [smem:[%s10]]
  %s12 = scalar_lea.smem %s0, 6
  %s13 = sld [smem:[%s12]]
  %s14 = scalar_lea.smem %s0, 7
  %s15 = sld [smem:[%s14]]
  %s16 = scalar_lea.smem %s0, 8
  %s17 = sld [smem:[%s16]]
  %s18 = scalar_lea.smem %s0, 9
  %s19 = sld [smem:[%s18]]
  %s20 = scalar_lea.smem %s0, 10
  %s21 = sld [smem:[%s20]]
  %s22 = scalar_lea.smem %s0, 11
  %s23 = sld [smem:[%s22]]
  %s24 = scalar_lea.smem %s0, 12
  %s25 = sld [smem:[%s24]]
  %s26 = scalar_lea.smem %s0, 13
  %s27 = sld [smem:[%s26]]
  %s28 = scalar_lea.smem %s0, 14
  %s29 = sld [smem:[%s28]]
  %s30 = scalar_lea.smem %s0, 15
  %s31 = sld [smem:[%s30]]
  %s32 = scalar_lea.smem %s0, 16
  %s33 = sld [smem:[%s32]]
  %s34 = scalar_lea.smem %s0, 17
  %s35 = sld [smem:[%s34]]
  %s36 = scalar_lea.smem %s0, 18
  %s37 = sld [smem:[%s36]]
  %s38 = scalar_lea.smem %s0, 19
  %s39 = sld [smem:[%s38]]
  %s40 = scalar_lea.smem %s0, 20
  %s41 = sld [smem:[%s40]]
  %s42 = scalar_lea.smem %s0, 21
  %s43 = sld [smem:[%s42]]
  %s44 = scalar_lea.smem %s0, 22
  %s45 = sld [smem:[%s44]]
  %s46 = scalar_lea.smem %s0, 23
  %s47 = sld [smem:[%s46]]
  %s48 = scalar_lea.smem %s0, 24
  %s49 = sld [smem:[%s48]]
  %s50 = scalar_lea.smem %s0, 25
  %s51 = sld [smem:[%s50]]
  %s52 = scalar_lea.smem %s0, 26
  %s53 = sld [smem:[%s52]]
  %s54 = scalar_lea.smem %s0, 27
  %s55 = sld [smem:[%s54]]
  %s56 = scalar_lea.smem %s0, 28
  %s57 = sld [smem:[%s56]]
  %s58 = scalar_lea.smem %s0, 29
  %s59 = sld [smem:[%s58]]
  %s60 = scalar_lea.smem %s0, 30
  %s61 = sld [smem:[%s60]]
  %62 = xla_tuple %s59, %s61
  %s63 = sld [smem:[#allocation0]]
  $region214: #{tpu_custom_call.1} parent=0
    _
  %s65 = ssub.s32 1, %s63
  %s66 = scalar_select 0, %s65, %s63
  %v67 = vstv %s57
  %68 = vst [vmem:[#allocation8] sm:$0x1] %v67
  $region1: #{tpu_custom_call.1} parent=0
    #allocation9 [shape = 'u8[8192]{0}', space=vmem, size = 0x2000, scoped, tag = 'input window, operand 2, single buffered']
    #allocation10 [shape = 's32[1]{0}', space=sflag, size = 0x4, scoped, tag = 'scoped memory for tpu_custom_call.1']
    #allocation11 [shape = 's32[1]{0}', space=sflag, size = 0x4, scoped, tag = 'scoped memory for tpu_custom_call.1']
    #allocation12 [shape = 'u8[4096]{0}', space=vmem, size = 0x1000, scoped, tag = 'input window, operand 3, single buffered']
    #allocation13 [shape = 's32[1]{0}', space=sflag, size = 0x4, scoped, tag = 'scoped memory for tpu_custom_call.1']
    #allocation14 [shape = 'u8[4096]{0}', space=vmem, size = 0x1000, scoped, tag = 'input window, operand 4, single buffered']
    #allocation15 [shape = 'u8[4096]{0}', space=vmem, size = 0x1000, scoped, tag = 'input window, operand 5, single buffered']
    #allocation16 [shape = 's32[1]{0}', space=sflag, size = 0x4, scoped, tag = 'scoped memory for tpu_custom_call.1']
    #allocation17 [shape = 'u8[4096]{0}', space=vmem, size = 0x1000, scoped, tag = 'input window, operand 6, single buffered']
    #allocation18 [shape = 'u8[4096]{0}', space=vmem, size = 0x1000, scoped, tag = 'input window, operand 7, single buffered']
    #allocation19 [shape = 's32[1]{0}', space=sflag, size = 0x4, scoped, tag = 'scoped memory for tpu_custom_call.1']
    #allocation20 [shape = 'u8[512]{0}', space=vmem, size = 0x400, scoped, tag = 'input window, operand 8, single buffered']
    #allocation21 [shape = 'u8[4096]{0}', space=vmem, size = 0x1000, scoped, tag = 'input window, operand 9, single buffered']
    #allocation22 [shape = 's32[1]{0}', space=sflag, size = 0x4, scoped, tag = 'scoped memory for tpu_custom_call.1']
    #allocation23 [shape = 'u8[512]{0}', space=vmem, size = 0x400, scoped, tag = 'input window, operand 10, single buffered']
    #allocation24 [shape = 'u8[512]{0}', space=vmem, size = 0x400, scoped, tag = 'input window, operand 12, single buffered']
    #allocation25 [shape = 's32[1]{0}', space=sflag, size = 0x4, scoped, tag = 'scoped memory for tpu_custom_call.1']
    #allocation26 [shape = 'u8[16384]{0}', space=vmem, size = 0x4000, scoped, tag = 'input window, operand 13, single buffered']
    #allocation27 [shape = 'u8[16384]{0}', space=vmem, size = 0x4000, scoped, tag = 'input window, operand 15, single buffered']
    #allocation28 [shape = 's32[1]{0}', space=sflag, size = 0x4, scoped, tag = 'scoped memory for tpu_custom_call.1']
    #allocation29 [shape = 'u8[32768]{0}', space=vmem, size = 0x8000, scoped, tag = 'input window, operand 17, single buffered']
    #allocation30 [shape = 'u8[131072]{0}', space=vmem, size = 0x20000, scoped, tag = 'input window, operand 18, single buffered']
    #allocation31 [shape = 's32[1]{0}', space=sflag, size = 0x4, scoped, tag = 'scoped memory for tpu_custom_call.1']
    #allocation32 [shape = 'u8[262144]{0}', space=vmem, size = 0x40000, scoped, tag = 'input window, operand 20, single buffered']
    #allocation33 [shape = 'u8[131072]{0}', space=vmem, size = 0x20000, scoped, tag = 'input window, operand 22, single buffered']
    #allocation34 [shape = 's32[1]{0}', space=sflag, size = 0x4, scoped, tag = 'scoped memory for tpu_custom_call.1']
    #allocation35 [shape = 'u8[32768]{0}', space=vmem, size = 0x8000, scoped, tag = 'input window, operand 24, single buffered']
    #allocation36 [shape = 'u8[131072]{0}', space=vmem, size = 0x20000, scoped, tag = 'input window, operand 25, single buffered']
    #allocation37 [shape = 's32[1]{0}', space=sflag, size = 0x4, scoped, tag = 'scoped memory for tpu_custom_call.1']
    #allocation38 [shape = 'u8[512]{0}', space=vmem, size = 0x400, scoped, tag = 'output window, operand 0, single buffered']
    #allocation39 [shape = 'u8[8192]{0}', space=vmem, size = 0x2000, scoped, tag = 'output window, operand 1, single buffered']
    #allocation40 [shape = 's32[1]{0}', space=sflag, size = 0x4, scoped, tag = 'scoped memory for tpu_custom_call.1']
    %69 = vsyncpa [#allocation10], 0
    %70 = vsyncpa [#allocation13], 0
    %71 = vsyncpa [#allocation16], 0
    %72 = vsyncpa [#allocation19], 0
    %73 = vsyncpa [#allocation22], 0
    %74 = vsyncpa [#allocation25], 0
    %75 = vsyncpa [#allocation28], 0
    %76 = vsyncpa [#allocation31], 0
    %77 = vsyncpa [#allocation34], 0
    %78 = vsyncpa [#allocation37], 0
    %79 = vsyncpa [#allocation11], 0
    %80 = vsyncpa [#allocation40], 0
    // Predicated region
    $region2: #{tpu_custom_call.1} parent=1 // pred_check
      _
    $region3: #{tpu_custom_call.1} parent=1 // pred_check_branch
      %82 = sbr.rel (0) target = $region5
    $region4: #{tpu_custom_call.1} parent=1 // pred_region
      _
    $region5: #{tpu_custom_call.1} parent=1 // pred_fallthru
      _
    // Predicated region
    $region6: #{tpu_custom_call.1} parent=1 // pred_check
      _
    $region7: #{tpu_custom_call.1} parent=1 // pred_check_branch
      %84 = sbr.rel (0) target = $region9
    $region8: #{tpu_custom_call.1} parent=1 // pred_region
      _
    $region9: #{tpu_custom_call.1} parent=1 // pred_fallthru
      _
    // Predicated region
    $region10: #{tpu_custom_call.1} parent=1 // pred_check
      _
    $region11: #{tpu_custom_call.1} parent=1 // pred_check_branch
      %86 = sbr.rel (0) target = $region13
    $region12: #{tpu_custom_call.1} parent=1 // pred_region
      %88 = vsyncadd [#allocation10], 0
      %s89 = sshll.u32 %s5, 4
      %s90 = int_to_ptr.hbm [resolvable:$true] %s89
      %s91 = sshll.u32 [#allocation9], 4
      %s92 = int_to_ptr.vmem [resolvable:$true] %s91
      %97 = dma.hbm_to_vmem [thread:$0]  %s90, 256, %s92, [#allocation10], 128, 128, 8
    $region13: #{tpu_custom_call.1} parent=1 // pred_fallthru
      _
    // Predicated region
    $region14: #{tpu_custom_call.1} parent=1 // pred_check
      _
    $region15: #{tpu_custom_call.1} parent=1 // pred_check_branch
      %99 = sbr.rel (0) target = $region17
    $region16: #{tpu_custom_call.1} parent=1 // pred_region
      %101 = vsyncadd [#allocation13], 0
      %s102 = sshll.u32 %s7, 4
      %s103 = int_to_ptr.hbm [resolvable:$true] %s102
      %s104 = sshll.u32 [#allocation12], 4
      %s105 = int_to_ptr.vmem [resolvable:$true] %s104
      %110 = dma.hbm_to_vmem [thread:$0]  %s103, 128, %s105, [#allocation13], 64, 64, 4
    $region17: #{tpu_custom_call.1} parent=1 // pred_fallthru
      _
    // Predicated region
    $region18: #{tpu_custom_call.1} parent=1 // pred_check
      _
    $region19: #{tpu_custom_call.1} parent=1 // pred_check_branch
      %112 = sbr.rel (0) target = $region21
    $region20: #{tpu_custom_call.1} parent=1 // pred_region
      %114 = vsyncadd [#allocation13], 0
      %s115 = sshll.u32 %s9, 4
      %s116 = int_to_ptr.hbm [resolvable:$true] %s115
      %s117 = sshll.u32 [#allocation14], 4
      %s118 = int_to_ptr.vmem [resolvable:$true] %s117
      %123 = dma.hbm_to_vmem [thread:$0]  %s116, 128, %s118, [#allocation13], 64, 64, 4
    $region21: #{tpu_custom_call.1} parent=1 // pred_fallthru
      _
    // Predicated region
    $region22: #{tpu_custom_call.1} parent=1 // pred_check
      _
    $region23: #{tpu_custom_call.1} parent=1 // pred_check_branch
      %125 = sbr.rel (0) target = $region25
    $region24: #{tpu_custom_call.1} parent=1 // pred_region
      %127 = vsyncadd [#allocation16], 0
      %s128 = sshll.u32 %s11, 4
      %s129 = int_to_ptr.hbm [resolvable:$true] %s128
      %s130 = sshll.u32 [#allocation15], 4
      %s131 = int_to_ptr.vmem [resolvable:$true] %s130
      %136 = dma.hbm_to_vmem [thread:$0]  %s129, 128, %s131, [#allocation16], 64, 64, 4
    $region25: #{tpu_custom_call.1} parent=1 // pred_fallthru
      _
    // Predicated region
    $region26: #{tpu_custom_call.1} parent=1 // pred_check
      _
    $region27: #{tpu_custom_call.1} parent=1 // pred_check_branch
      %138 = sbr.rel (0) target = $region29
    $region28: #{tpu_custom_call.1} parent=1 // pred_region
      %140 = vsyncadd [#allocation16], 0
      %s141 = sshll.u32 %s13, 4
      %s142 = int_to_ptr.hbm [resolvable:$true] %s141
      %s143 = sshll.u32 [#allocation17], 4
      %s144 = int_to_ptr.vmem [resolvable:$true] %s143
      %149 = dma.hbm_to_vmem [thread:$0]  %s142, 128, %s144, [#allocation16], 64, 64, 4
    $region29: #{tpu_custom_call.1} parent=1 // pred_fallthru
      _
    // Predicated region
    $region30: #{tpu_custom_call.1} parent=1 // pred_check
      _
    $region31: #{tpu_custom_call.1} parent=1 // pred_check_branch
      %151 = sbr.rel (0) target = $region33
    $region32: #{tpu_custom_call.1} parent=1 // pred_region
      %153 = vsyncadd [#allocation19], 0
      %s155 = sshll.u32 %s15, 4
      %s156 = int_to_ptr.hbm [resolvable:$true] %s155
      %s157 = sshll.u32 [#allocation18], 4
      %s158 = int_to_ptr.vmem [resolvable:$true] %s157
      %160 = dma.hbm_to_vmem [thread:$0]  %s156, 128, %s158, [#allocation19]
    $region33: #{tpu_custom_call.1} parent=1 // pred_fallthru
      _
    // Predicated region
    $region34: #{tpu_custom_call.1} parent=1 // pred_check
      _
    $region35: #{tpu_custom_call.1} parent=1 // pred_check_branch
      %162 = sbr.rel (0) target = $region37
    $region36: #{tpu_custom_call.1} parent=1 // pred_region
      %164 = vsyncadd [#allocation19], 0
      %s166 = sshll.u32 %s17, 4
      %s167 = int_to_ptr.hbm [resolvable:$true] %s166
      %s168 = sshll.u32 [#allocation20], 4
      %s169 = int_to_ptr.vmem [resolvable:$true] %s168
      %171 = dma.hbm_to_vmem [thread:$0]  %s167, 16, %s169, [#allocation19]
    $region37: #{tpu_custom_call.1} parent=1 // pred_fallthru
      _
    // Predicated region
    $region38: #{tpu_custom_call.1} parent=1 // pred_check
      _
    $region39: #{tpu_custom_call.1} parent=1 // pred_check_branch
      %173 = sbr.rel (0) target = $region41
    $region40: #{tpu_custom_call.1} parent=1 // pred_region
      %175 = vsyncadd [#allocation22], 0
      %s177 = sshll.u32 %s19, 4
      %s178 = int_to_ptr.hbm [resolvable:$true] %s177
      %s179 = sshll.u32 [#allocation21], 4
      %s180 = int_to_ptr.vmem [resolvable:$true] %s179
      %182 = dma.hbm_to_vmem [thread:$0]  %s178, 128, %s180, [#allocation22]
    $region41: #{tpu_custom_call.1} parent=1 // pred_fallthru
      _
    // Predicated region
    $region42: #{tpu_custom_call.1} parent=1 // pred_check
      _
    $region43: #{tpu_custom_call.1} parent=1 // pred_check_branch
      %184 = sbr.rel (0) target = $region45
    $region44: #{tpu_custom_call.1} parent=1 // pred_region
      %186 = vsyncadd [#allocation22], 0
      %s188 = sshll.u32 %s21, 4
      %s189 = int_to_ptr.hbm [resolvable:$true] %s188
      %s190 = sshll.u32 [#allocation23], 4
      %s191 = int_to_ptr.vmem [resolvable:$true] %s190
      %193 = dma.hbm_to_vmem [thread:$0]  %s189, 16, %s191, [#allocation22]
    $region45: #{tpu_custom_call.1} parent=1 // pred_fallthru
      _
    // Predicated region
    $region46: #{tpu_custom_call.1} parent=1 // pred_check
      _
    $region47: #{tpu_custom_call.1} parent=1 // pred_check_branch
      %195 = sbr.rel (0) target = $region49
    $region48: #{tpu_custom_call.1} parent=1 // pred_region
      _
    $region49: #{tpu_custom_call.1} parent=1 // pred_fallthru
      _
    // Predicated region
    $region50: #{tpu_custom_call.1} parent=1 // pred_check
      _
    $region51: #{tpu_custom_call.1} parent=1 // pred_check_branch
      %197 = sbr.rel (0) target = $region53
    $region52: #{tpu_custom_call.1} parent=1 // pred_region
      %199 = vsyncadd [#allocation25], 0
      %s201 = sshll.u32 %s25, 4
      %s202 = int_to_ptr.hbm [resolvable:$true] %s201
      %s203 = sshll.u32 [#allocation24], 4
      %s204 = int_to_ptr.vmem [resolvable:$true] %s203
      %206 = dma.hbm_to_vmem [thread:$0]  %s202, 16, %s204, [#allocation25]
    $region53: #{tpu_custom_call.1} parent=1 // pred_fallthru
      _
    // Predicated region
    $region54: #{tpu_custom_call.1} parent=1 // pred_check
      _
    $region55: #{tpu_custom_call.1} parent=1 // pred_check_branch
      %208 = sbr.rel (0) target = $region57
    $region56: #{tpu_custom_call.1} parent=1 // pred_region
      %210 = vsyncadd [#allocation25], 0
      %s211 = sshll.u32 %s27, 4
      %s212 = int_to_ptr.hbm [resolvable:$true] %s211
      %s213 = sshll.u32 [#allocation26], 4
      %s214 = int_to_ptr.vmem [resolvable:$true] %s213
      %219 = dma.hbm_to_vmem [thread:$0]  %s212, 512, %s214, [#allocation25], 128, 128, 8
    $region57: #{tpu_custom_call.1} parent=1 // pred_fallthru
      _
    // Predicated region
    $region58: #{tpu_custom_call.1} parent=1 // pred_check
      _
    $region59: #{tpu_custom_call.1} parent=1 // pred_check_branch
      %221 = sbr.rel (0) target = $region61
    $region60: #{tpu_custom_call.1} parent=1 // pred_region
      _
    $region61: #{tpu_custom_call.1} parent=1 // pred_fallthru
      _
    // Predicated region
    $region62: #{tpu_custom_call.1} parent=1 // pred_check
      _
    $region63: #{tpu_custom_call.1} parent=1 // pred_check_branch
      %223 = sbr.rel (0) target = $region65
    $region64: #{tpu_custom_call.1} parent=1 // pred_region
      %225 = vsyncadd [#allocation28], 0
      %s226 = sshll.u32 %s31, 4
      %s227 = int_to_ptr.hbm [resolvable:$true] %s226
      %s228 = sshll.u32 [#allocation27], 4
      %s229 = int_to_ptr.vmem [resolvable:$true] %s228
      %234 = dma.hbm_to_vmem [thread:$0]  %s227, 512, %s229, [#allocation28], 128, 128, 8
    $region65: #{tpu_custom_call.1} parent=1 // pred_fallthru
      _
    // Predicated region
    $region66: #{tpu_custom_call.1} parent=1 // pred_check
      _
    $region67: #{tpu_custom_call.1} parent=1 // pred_check_branch
      %236 = sbr.rel (0) target = $region69
    $region68: #{tpu_custom_call.1} parent=1 // pred_region
      _
    $region69: #{tpu_custom_call.1} parent=1 // pred_fallthru
      _
    // Predicated region
    $region70: #{tpu_custom_call.1} parent=1 // pred_check
      _
    $region71: #{tpu_custom_call.1} parent=1 // pred_check_branch
      %238 = sbr.rel (0) target = $region73
    $region72: #{tpu_custom_call.1} parent=1 // pred_region
      %240 = vsyncadd [#allocation28], 0
      %s241 = sshll.u32 %s35, 4
      %s242 = int_to_ptr.hbm [resolvable:$true] %s241
      %s243 = sshll.u32 [#allocation29], 4
      %s244 = int_to_ptr.vmem [resolvable:$true] %s243
      %249 = dma.hbm_to_vmem [thread:$0]  %s242, 1024, %s244, [#allocation28], 256, 256, 16
    $region73: #{tpu_custom_call.1} parent=1 // pred_fallthru
      _
    // Predicated region
    $region74: #{tpu_custom_call.1} parent=1 // pred_check
      _
    $region75: #{tpu_custom_call.1} parent=1 // pred_check_branch
      %251 = sbr.rel (0) target = $region77
    $region76: #{tpu_custom_call.1} parent=1 // pred_region
      %253 = vsyncadd [#allocation31], 0
      %s254 = sshll.u32 %s37, 4
      %s255 = int_to_ptr.hbm [resolvable:$true] %s254
      %s256 = sshll.u32 [#allocation30], 4
      %s257 = int_to_ptr.vmem [resolvable:$true] %s256
      %262 = dma.hbm_to_vmem [thread:$0]  %s255, 4096, %s257, [#allocation31], 256, 256, 16
    $region77: #{tpu_custom_call.1} parent=1 // pred_fallthru
      _
    // Predicated region
    $region78: #{tpu_custom_call.1} parent=1 // pred_check
      _
    $region79: #{tpu_custom_call.1} parent=1 // pred_check_branch
      %264 = sbr.rel (0) target = $region81
    $region80: #{tpu_custom_call.1} parent=1 // pred_region
      _
    $region81: #{tpu_custom_call.1} parent=1 // pred_fallthru
      _
    // Predicated region
    $region82: #{tpu_custom_call.1} parent=1 // pred_check
      _
    $region83: #{tpu_custom_call.1} parent=1 // pred_check_branch
      %266 = sbr.rel (0) target = $region85
    $region84: #{tpu_custom_call.1} parent=1 // pred_region
      %268 = vsyncadd [#allocation31], 0
      %s269 = sshll.u32 %s41, 4
      %s270 = int_to_ptr.hbm [resolvable:$true] %s269
      %s271 = sshll.u32 [#allocation32], 4
      %s272 = int_to_ptr.vmem [resolvable:$true] %s271
      %277 = dma.hbm_to_vmem [thread:$0]  %s270, 8192, %s272, [#allocation31], 256, 256, 16
    $region85: #{tpu_custom_call.1} parent=1 // pred_fallthru
      _
    // Predicated region
    $region86: #{tpu_custom_call.1} parent=1 // pred_check
      _
    $region87: #{tpu_custom_call.1} parent=1 // pred_check_branch
      %279 = sbr.rel (0) target = $region89
    $region88: #{tpu_custom_call.1} parent=1 // pred_region
      _
    $region89: #{tpu_custom_call.1} parent=1 // pred_fallthru
      _
    // Predicated region
    $region90: #{tpu_custom_call.1} parent=1 // pred_check
      _
    $region91: #{tpu_custom_call.1} parent=1 // pred_check_branch
      %281 = sbr.rel (0) target = $region93
    $region92: #{tpu_custom_call.1} parent=1 // pred_region
      %283 = vsyncadd [#allocation34], 0
      %s284 = sshll.u32 %s45, 4
      %s285 = int_to_ptr.hbm [resolvable:$true] %s284
      %s286 = sshll.u32 [#allocation33], 4
      %s287 = int_to_ptr.vmem [resolvable:$true] %s286
      %292 = dma.hbm_to_vmem [thread:$0]  %s285, 4096, %s287, [#allocation34], 128, 128, 8
    $region93: #{tpu_custom_call.1} parent=1 // pred_fallthru
      _
    // Predicated region
    $region94: #{tpu_custom_call.1} parent=1 // pred_check
      _
    $region95: #{tpu_custom_call.1} parent=1 // pred_check_branch
      %294 = sbr.rel (0) target = $region97
    $region96: #{tpu_custom_call.1} parent=1 // pred_region
      _
    $region97: #{tpu_custom_call.1} parent=1 // pred_fallthru
      _
    // Predicated region
    $region98: #{tpu_custom_call.1} parent=1 // pred_check
      _
    $region99: #{tpu_custom_call.1} parent=1 // pred_check_branch
      %296 = sbr.rel (0) target = $region101
    $region100: #{tpu_custom_call.1} parent=1 // pred_region
      %298 = vsyncadd [#allocation34], 0
      %s299 = sshll.u32 %s49, 4
      %s300 = int_to_ptr.hbm [resolvable:$true] %s299
      %s301 = sshll.u32 [#allocation35], 4
      %s302 = int_to_ptr.vmem [resolvable:$true] %s301
      %307 = dma.hbm_to_vmem [thread:$0]  %s300, 1024, %s302, [#allocation34], 256, 256, 16
    $region101: #{tpu_custom_call.1} parent=1 // pred_fallthru
      _
    // Predicated region
    $region102: #{tpu_custom_call.1} parent=1 // pred_check
      _
    $region103: #{tpu_custom_call.1} parent=1 // pred_check_branch
      %309 = sbr.rel (0) target = $region105
    $region104: #{tpu_custom_call.1} parent=1 // pred_region
      %311 = vsyncadd [#allocation37], 0
      %s312 = sshll.u32 %s51, 4
      %s313 = int_to_ptr.hbm [resolvable:$true] %s312
      %s314 = sshll.u32 [#allocation36], 4
      %s315 = int_to_ptr.vmem [resolvable:$true] %s314
      %320 = dma.hbm_to_vmem [thread:$0]  %s313, 4096, %s315, [#allocation37], 256, 256, 16
    $region105: #{tpu_custom_call.1} parent=1 // pred_fallthru
      _
    // Predicated region
    $region106: #{tpu_custom_call.1} parent=1 // pred_check
      _
    $region107: #{tpu_custom_call.1} parent=1 // pred_check_branch
      %322 = sbr.rel (0) target = $region109
    $region108: #{tpu_custom_call.1} parent=1 // pred_region
      _
    $region109: #{tpu_custom_call.1} parent=1 // pred_fallthru
      _
    // Predicated region
    $region110: #{tpu_custom_call.1} parent=1 // pred_check
      _
    $region111: #{tpu_custom_call.1} parent=1 // pred_check_branch
      %324 = sbr.rel (0) target = $region113
    $region112: #{tpu_custom_call.1} parent=1 // pred_region
      _
    $region113: #{tpu_custom_call.1} parent=1 // pred_fallthru
      _
    // Predicated region
    $region114: #{tpu_custom_call.1} parent=1 // pred_check
      _
    $region115: #{tpu_custom_call.1} parent=1 // pred_check_branch
      %326 = sbr.rel (0) target = $region117
    $region116: #{tpu_custom_call.1} parent=1 // pred_region
      _
    $region117: #{tpu_custom_call.1} parent=1 // pred_fallthru
      _
    // Predicated region
    $region118: #{tpu_custom_call.1} parent=1 // pred_check
      _
    $region119: #{tpu_custom_call.1} parent=1 // pred_check_branch
      %328 = sbr.rel (0) target = $region121
    $region120: #{tpu_custom_call.1} parent=1 // pred_region
      %330 = dma.done [#allocation10], 256
    $region121: #{tpu_custom_call.1} parent=1 // pred_fallthru
      _
    // Predicated region
    $region122: #{tpu_custom_call.1} parent=1 // pred_check
      _
    $region123: #{tpu_custom_call.1} parent=1 // pred_check_branch
      %332 = sbr.rel (0) target = $region125
    $region124: #{tpu_custom_call.1} parent=1 // pred_region
      %334 = dma.done [#allocation13], 128
    $region125: #{tpu_custom_call.1} parent=1 // pred_fallthru
      _
    // Predicated region
    $region126: #{tpu_custom_call.1} parent=1 // pred_check
      _
    $region127: #{tpu_custom_call.1} parent=1 // pred_check_branch
      %336 = sbr.rel (0) target = $region129
    $region128: #{tpu_custom_call.1} parent=1 // pred_region
      %338 = dma.done [#allocation13], 128
    $region129: #{tpu_custom_call.1} parent=1 // pred_fallthru
      _
    // Predicated region
    $region130: #{tpu_custom_call.1} parent=1 // pred_check
      _
    $region131: #{tpu_custom_call.1} parent=1 // pred_check_branch
      %340 = sbr.rel (0) target = $region133
    $region132: #{tpu_custom_call.1} parent=1 // pred_region
      %342 = dma.done [#allocation16], 128
    $region133: #{tpu_custom_call.1} parent=1 // pred_fallthru
      _
    // Predicated region
    $region134: #{tpu_custom_call.1} parent=1 // pred_check
      _
    $region135: #{tpu_custom_call.1} parent=1 // pred_check_branch
      %344 = sbr.rel (0) target = $region137
    $region136: #{tpu_custom_call.1} parent=1 // pred_region
      %346 = dma.done [#allocation16], 128
    $region137: #{tpu_custom_call.1} parent=1 // pred_fallthru
      _
    // Predicated region
    $region138: #{tpu_custom_call.1} parent=1 // pred_check
      _
    $region139: #{tpu_custom_call.1} parent=1 // pred_check_branch
      %348 = sbr.rel (0) target = $region141
    $region140: #{tpu_custom_call.1} parent=1 // pred_region
      %350 = dma.done [#allocation19], 128
    $region141: #{tpu_custom_call.1} parent=1 // pred_fallthru
      _
    // Predicated region
    $region142: #{tpu_custom_call.1} parent=1 // pred_check
      _
    $region143: #{tpu_custom_call.1} parent=1 // pred_check_branch
      %352 = sbr.rel (0) target = $region145
    $region144: #{tpu_custom_call.1} parent=1 // pred_region
      %354 = dma.done [#allocation19], 16
    $region145: #{tpu_custom_call.1} parent=1 // pred_fallthru
      _
    // Predicated region
    $region146: #{tpu_custom_call.1} parent=1 // pred_check
      _
    $region147: #{tpu_custom_call.1} parent=1 // pred_check_branch
      %356 = sbr.rel (0) target = $region149
    $region148: #{tpu_custom_call.1} parent=1 // pred_region
      %358 = dma.done [#allocation22], 128
    $region149: #{tpu_custom_call.1} parent=1 // pred_fallthru
      _
    // Predicated region
    $region150: #{tpu_custom_call.1} parent=1 // pred_check
      _
    $region151: #{tpu_custom_call.1} parent=1 // pred_check_branch
      %360 = sbr.rel (0) target = $region153
    $region152: #{tpu_custom_call.1} parent=1 // pred_region
      %362 = dma.done [#allocation22], 16
    $region153: #{tpu_custom_call.1} parent=1 // pred_fallthru
      _
    // Predicated region
    $region154: #{tpu_custom_call.1} parent=1 // pred_check
      _
    $region155: #{tpu_custom_call.1} parent=1 // pred_check_branch
      %364 = sbr.rel (0) target = $region157
    $region156: #{tpu_custom_call.1} parent=1 // pred_region
      %366 = dma.done [#allocation25], 16
    $region157: #{tpu_custom_call.1} parent=1 // pred_fallthru
      _
    // Predicated region
    $region158: #{tpu_custom_call.1} parent=1 // pred_check
      _
    $region159: #{tpu_custom_call.1} parent=1 // pred_check_branch
      %368 = sbr.rel (0) target = $region161
    $region160: #{tpu_custom_call.1} parent=1 // pred_region
      %370 = dma.done [#allocation25], 512
    $region161: #{tpu_custom_call.1} parent=1 // pred_fallthru
      _
    // Predicated region
    $region162: #{tpu_custom_call.1} parent=1 // pred_check
      _
    $region163: #{tpu_custom_call.1} parent=1 // pred_check_branch
      %372 = sbr.rel (0) target = $region165
    $region164: #{tpu_custom_call.1} parent=1 // pred_region
      %374 = dma.done [#allocation28], 512
    $region165: #{tpu_custom_call.1} parent=1 // pred_fallthru
      _
    // Predicated region
    $region166: #{tpu_custom_call.1} parent=1 // pred_check
      _
    $region167: #{tpu_custom_call.1} parent=1 // pred_check_branch
      %376 = sbr.rel (0) target = $region169
    $region168: #{tpu_custom_call.1} parent=1 // pred_region
      %378 = dma.done [#allocation28], 1024
    $region169: #{tpu_custom_call.1} parent=1 // pred_fallthru
      _
    // Predicated region
    $region170: #{tpu_custom_call.1} parent=1 // pred_check
      _
    $region171: #{tpu_custom_call.1} parent=1 // pred_check_branch
      %380 = sbr.rel (0) target = $region173
    $region172: #{tpu_custom_call.1} parent=1 // pred_region
      %382 = dma.done [#allocation31], 4096
    $region173: #{tpu_custom_call.1} parent=1 // pred_fallthru
      _
    // Predicated region
    $region174: #{tpu_custom_call.1} parent=1 // pred_check
      _
    $region175: #{tpu_custom_call.1} parent=1 // pred_check_branch
      %384 = sbr.rel (0) target = $region177
    $region176: #{tpu_custom_call.1} parent=1 // pred_region
      %386 = dma.done [#allocation31], 8192
    $region177: #{tpu_custom_call.1} parent=1 // pred_fallthru
      _
    // Predicated region
    $region178: #{tpu_custom_call.1} parent=1 // pred_check
      _
    $region179: #{tpu_custom_call.1} parent=1 // pred_check_branch
      %388 = sbr.rel (0) target = $region181
    $region180: #{tpu_custom_call.1} parent=1 // pred_region
      %390 = dma.done [#allocation34], 4096
    $region181: #{tpu_custom_call.1} parent=1 // pred_fallthru
      _
    // Predicated region
    $region182: #{tpu_custom_call.1} parent=1 // pred_check
      _
    $region183: #{tpu_custom_call.1} parent=1 // pred_check_branch
      %392 = sbr.rel (0) target = $region185
    $region184: #{tpu_custom_call.1} parent=1 // pred_region
      %394 = dma.done [#allocation34], 1024
    $region185: #{tpu_custom_call.1} parent=1 // pred_fallthru
      _
    // Predicated region
    $region186: #{tpu_custom_call.1} parent=1 // pred_check
      _
    $region187: #{tpu_custom_call.1} parent=1 // pred_check_branch
      %396 = sbr.rel (0) target = $region189
    $region188: #{tpu_custom_call.1} parent=1 // pred_region
      %398 = dma.done [#allocation37], 4096
    $region189: #{tpu_custom_call.1} parent=1 // pred_fallthru
      _
    %p400 = scmp.eq.s32.totalorder 0, 0
    // Predicated region
    $region190: #{tpu_custom_call.1} parent=1 // pred_check
      %p401 = pneg %p400
    $region191: #{tpu_custom_call.1} parent=1 // pred_check_branch
      %403 = sbr.rel (%p401) target = $region193
    $region192: #{tpu_custom_call.1} parent=1 // pred_region
      %v404 = vld [vmem:[%s1] sm:$0xff]
      %v405 = vld [vmem:[%s1 + $0x8] sm:$0xff]
      %v406 = vld [vmem:[#allocation18] sm:$0xff]
      %v407 = vld [vmem:[#allocation20] sm:$0x1]
      %v409 = vperm.slane %v407, 0
      %vm411 = vcmask 64512
      %v413 = vsel %vm411, %v404, 0
      %v416 = vsel %vm411, %v405, 0
      %418 = vmatpush.msra.mxu0 0.0
      %419 = vmatpush.msra.mxu0 0.0
      %420 = vmatpush.msra.mxu0 0.0
      %421 = vmatpush.msra.mxu0 0.0
      %422 = vmatpush.msra.mxu0 0.0
      %423 = vmatpush.msra.mxu0 0.0
      %424 = vmatpush.msra.mxu0 0.0
      %425 = vmatpush.msra.mxu0 0.0
      %426 = vmatpush.msra.mxu0 0.0
      %427 = vmatpush.msra.mxu0 0.0
      %428 = vmatpush.msra.mxu0 0.0
      %429 = vmatpush.msra.mxu0 0.0
      %430 = vmatpush.msra.mxu0 0.0
      %431 = vmatpush.msra.mxu0 0.0
      %432 = vmatpush.msra.mxu0 0.0
      %433 = vmatpush.msra.mxu0 %v406
      %434 = vmatmul.f32.gmra.mxu0 %v413
      %v435 = vpop.f32.mrf.mxu0
      %v436 = vadd.f32 %v409, %v435
      %437 = vmatmul.f32.gmra.mxu0 %v416
      %v438 = vpop.f32.mrf.mxu0
      %v439 = vadd.f32 %v409, %v438
      %440 = vdwg.mxu0
      %vm441 = vcmask 261120
      %442 = vst.msk [vmem:[#allocation2] sm:$0xff] %vm441, %v436
      %443 = vst.msk [vmem:[#allocation2 + $0x8] sm:$0xff] %vm441, %v439
      %v444 = vld [vmem:[%s3] sm:$0xff]
      %v445 = vld [vmem:[%s3 + $0x8] sm:$0xff]
      %v446 = vld [vmem:[#allocation21] sm:$0xff]
      %v447 = vld [vmem:[#allocation23] sm:$0x1]
      %v449 = vperm.slane %v447, 0
      %v452 = vsel %vm411, %v444, 0
      %v455 = vsel %vm411, %v445, 0
      %457 = vmatpush.msra.mxu0 0.0
      %458 = vmatpush.msra.mxu0 0.0
      %459 = vmatpush.msra.mxu0 0.0
      %460 = vmatpush.msra.mxu0 0.0
      %461 = vmatpush.msra.mxu0 0.0
      %462 = vmatpush.msra.mxu0 0.0
      %463 = vmatpush.msra.mxu0 0.0
      %464 = vmatpush.msra.mxu0 0.0
      %465 = vmatpush.msra.mxu0 0.0
      %466 = vmatpush.msra.mxu0 0.0
      %467 = vmatpush.msra.mxu0 0.0
      %468 = vmatpush.msra.mxu0 0.0
      %469 = vmatpush.msra.mxu0 0.0
      %470 = vmatpush.msra.mxu0 0.0
      %471 = vmatpush.msra.mxu0 0.0
      %472 = vmatpush.msra.mxu0 %v446
      %473 = vmatmul.f32.gmra.mxu0 %v452
      %v474 = vpop.f32.mrf.mxu0
      %v475 = vadd.f32 %v449, %v474
      %476 = vmatmul.f32.gmra.mxu0 %v455
      %v477 = vpop.f32.mrf.mxu0
      %v478 = vadd.f32 %v449, %v477
      %479 = vdwg.mxu0
      %480 = vst.msk [vmem:[#allocation3] sm:$0xff] %vm441, %v475
      %481 = vst.msk [vmem:[#allocation3 + $0x8] sm:$0xff] %vm441, %v478
      %vm482 = vcmask 7168
      %483 = vst.msk [vmem:[#allocation4] sm:$0xff] %vm482, -inf
      %484 = vst.msk [vmem:[#allocation4 + $0x8] sm:$0xff] %vm482, -inf
      %485 = vst.msk [vmem:[#allocation5] sm:$0xff] %vm482, -inf
      %486 = vst.msk [vmem:[#allocation5 + $0x8] sm:$0xff] %vm482, -inf
      %vm487 = vcmask 269312
      %488 = vst.msk [vmem:[#allocation6] sm:$0xff] %vm487, 0.0
      %489 = vst.msk [vmem:[#allocation6 + $0x8] sm:$0xff] %vm487, 0.0
      %490 = vst.msk [vmem:[#allocation7] sm:$0xff] %vm487, 0.0
      %491 = vst.msk [vmem:[#allocation7 + $0x8] sm:$0xff] %vm487, 0.0
    $region193: #{tpu_custom_call.1} parent=1 // pred_fallthru
      _
    %v492 = vld [vmem:[#allocation2] sm:$0xff]
    %v493 = vld [vmem:[#allocation2 + $0x8] sm:$0xff]
    %v494 = vpack.c.bf16 %v493, %v492
    %v495 = vld [vmem:[#allocation12] sm:$0xf]
    %v496 = vld [vmem:[#allocation12 + $0x4] sm:$0xf]
    %v499 = vunpack.c.l.b16 %v495
    %v500 = vunpack.c.l.b16 %v496
    %v501 = vpack.c.b16 %v500, %v499
    %vm502 = vcmask 261120
    %v504 = vsel %vm502, %v494, 0
    %v507 = vsel %vm502, %v501, 0
    %509 = vmatpush.bf16.xpose.msra.mxu0 0
    %510 = vmatpush.bf16.xpose.msra.mxu0 0
    %511 = vmatpush.bf16.xpose.msra.mxu0 0
    %512 = vmatpush.bf16.xpose.msra.mxu0 0
    %513 = vmatpush.bf16.xpose.msra.mxu0 0
    %514 = vmatpush.bf16.xpose.msra.mxu0 0
    %515 = vmatpush.bf16.xpose.msra.mxu0 0
    %516 = vmatpush.bf16.xpose.msra.mxu0 %v507
    %517 = vmatmul.bf16.gmra.mxu0 %v504
    %v518 = vpop.f32.mrf.mxu0
    %v519 = vadd.f32 0.0, %v518
    %v520 = vpop.f32.mrf.mxu0
    %v521 = vadd.f32 0.0, %v520
    %522 = vdwg.mxu0
    %v523 = vld [vmem:[#allocation4] sm:$0xff]
    %v524 = vld [vmem:[#allocation4 + $0x8] sm:$0xff]
    %vm525 = vcmask 130048
    %v526 = vsel %vm525, %v519, -inf
    %527 = vmax.xlane.f32.xlu0 %v526
    %v528 = vpop.xlane.xlu0 %527
    %v529 = vsel %vm525, %v521, -inf
    %530 = vmax.xlane.f32.xlu0 %v529
    %v531 = vpop.xlane.xlu0 %530
    %v532 = vmax.f32 %v523, %v528
    %v533 = vmax.f32 %v524, %v531
    %535 = vset.pattern.permute.xlu0 0
    %536 = vperm.xlu0 %535, %v532
    %v537 = vpop.permute.xlu0 %536
    %540 = vset.pattern.permute.xlu0 0
    %541 = vperm.xlu0 %540, %v533
    %v542 = vpop.permute.xlu0 %541
    %v544 = vsub.f32 %v519, %v537
    %v545 = vsub.f32 %v521, %v542
    %v546 = vmul.f32 %v544, 1.442695
    %v547 = vpow.pop %v546
    %v548 = vmul.f32 %v545, 1.442695
    %v549 = vpow.pop %v548
    %v550 = vsub.f32 %v523, %v532
    %v551 = vsub.f32 %v524, %v533
    %v552 = vmul.f32 %v550, 1.442695
    %v553 = vpow.pop %v552
    %v554 = vmul.f32 %v551, 1.442695
    %v555 = vpow.pop %v554
    %v556 = vld [vmem:[#allocation6] sm:$0xff]
    %v557 = vld [vmem:[#allocation6 + $0x8] sm:$0xff]
    %559 = vset.pattern.permute.xlu0 0
    %560 = vperm.xlu0 %559, %v553
    %v561 = vpop.permute.xlu0 %560
    %564 = vset.pattern.permute.xlu0 0
    %565 = vperm.xlu0 %564, %v555
    %v566 = vpop.permute.xlu0 %565
    %v568 = vmul.f32 %v561, %v556
    %v569 = vmul.f32 %v566, %v557
    %v570 = vpack.c.bf16 %v549, %v547
    %v571 = vld [vmem:[#allocation14] sm:$0xf]
    %v572 = vld [vmem:[#allocation14 + $0x4] sm:$0xf]
    %v575 = vunpack.c.l.b16 %v571
    %v576 = vunpack.c.l.b16 %v572
    %v577 = vpack.c.b16 %v576, %v575
    %v580 = vsel %vm525, %v570, 0
    %582 = vmatpush.bf16.msra.mxu0 0
    %583 = vmatpush.bf16.msra.mxu0 0
    %584 = vmatpush.bf16.msra.mxu0 0
    %585 = vmatpush.bf16.msra.mxu0 0
    %586 = vmatpush.bf16.msra.mxu0 0
    %587 = vmatpush.bf16.msra.mxu0 0
    %588 = vmatpush.bf16.msra.mxu0 0
    %589 = vmatpush.bf16.msra.mxu0 %v577
    %590 = vmatmul.bf16.gmra.mxu0 %v580
    %v591 = vpop.f32.mrf.mxu0
    %v592 = vadd.f32 0.0, %v591
    %v593 = vpop.f32.mrf.mxu0
    %v594 = vadd.f32 0.0, %v593
    %595 = vdwg.mxu0
    %v596 = vadd.f32 %v568, %v592
    %v597 = vadd.f32 %v569, %v594
    %vm598 = vcmask 269312
    %599 = vst.msk [vmem:[#allocation6] sm:$0xff] %vm598, %v596
    %600 = vst.msk [vmem:[#allocation6 + $0x8] sm:$0xff] %vm598, %v597
    %vm601 = vcmask 7168
    %602 = vst.msk [vmem:[#allocation4] sm:$0xff] %vm601, %v532
    %603 = vst.msk [vmem:[#allocation4 + $0x8] sm:$0xff] %vm601, %v533
    %v604 = vld [vmem:[#allocation3] sm:$0xff]
    %v605 = vld [vmem:[#allocation3 + $0x8] sm:$0xff]
    %v606 = vpack.c.bf16 %v605, %v604
    %v607 = vld [vmem:[#allocation15] sm:$0xf]
    %v608 = vld [vmem:[#allocation15 + $0x4] sm:$0xf]
    %v611 = vunpack.c.l.b16 %v607
    %v612 = vunpack.c.l.b16 %v608
    %v613 = vpack.c.b16 %v612, %v611
    %v615 = vsel %vm502, %v606, 0
    %v618 = vsel %vm502, %v613, 0
    %620 = vmatpush.bf16.xpose.msra.mxu0 0
    %621 = vmatpush.bf16.xpose.msra.mxu0 0
    %622 = vmatpush.bf16.xpose.msra.mxu0 0
    %623 = vmatpush.bf16.xpose.msra.mxu0 0
    %624 = vmatpush.bf16.xpose.msra.mxu0 0
    %625 = vmatpush.bf16.xpose.msra.mxu0 0
    %626 = vmatpush.bf16.xpose.msra.mxu0 0
    %627 = vmatpush.bf16.xpose.msra.mxu0 %v618
    %628 = vmatmul.bf16.gmra.mxu0 %v615
    %v629 = vpop.f32.mrf.mxu0
    %v630 = vadd.f32 0.0, %v629
    %v631 = vpop.f32.mrf.mxu0
    %v632 = vadd.f32 0.0, %v631
    %633 = vdwg.mxu0
    %v634 = vld [vmem:[#allocation5] sm:$0xff]
    %v635 = vld [vmem:[#allocation5 + $0x8] sm:$0xff]
    %v636 = vsel %vm525, %v630, -inf
    %637 = vmax.xlane.f32.xlu0 %v636
    %v638 = vpop.xlane.xlu0 %637
    %v639 = vsel %vm525, %v632, -inf
    %640 = vmax.xlane.f32.xlu0 %v639
    %v641 = vpop.xlane.xlu0 %640
    %v642 = vmax.f32 %v634, %v638
    %v643 = vmax.f32 %v635, %v641
    %645 = vset.pattern.permute.xlu0 0
    %646 = vperm.xlu0 %645, %v642
    %v647 = vpop.permute.xlu0 %646
    %650 = vset.pattern.permute.xlu0 0
    %651 = vperm.xlu0 %650, %v643
    %v652 = vpop.permute.xlu0 %651
    %v654 = vsub.f32 %v630, %v647
    %v655 = vsub.f32 %v632, %v652
    %v656 = vmul.f32 %v654, 1.442695
    %v657 = vpow.pop %v656
    %v658 = vmul.f32 %v655, 1.442695
    %v659 = vpow.pop %v658
    %v660 = vsub.f32 %v634, %v642
    %v661 = vsub.f32 %v635, %v643
    %v662 = vmul.f32 %v660, 1.442695
    %v663 = vpow.pop %v662
    %v664 = vmul.f32 %v661, 1.442695
    %v665 = vpow.pop %v664
    %v666 = vld [vmem:[#allocation7] sm:$0xff]
    %v667 = vld [vmem:[#allocation7 + $0x8] sm:$0xff]
    %669 = vset.pattern.permute.xlu0 0
    %670 = vperm.xlu0 %669, %v663
    %v671 = vpop.permute.xlu0 %670
    %674 = vset.pattern.permute.xlu0 0
    %675 = vperm.xlu0 %674, %v665
    %v676 = vpop.permute.xlu0 %675
    %v678 = vmul.f32 %v671, %v666
    %v679 = vmul.f32 %v676, %v667
    %v680 = vpack.c.bf16 %v659, %v657
    %v681 = vld [vmem:[#allocation17] sm:$0xf]
    %v682 = vld [vmem:[#allocation17 + $0x4] sm:$0xf]
    %v685 = vunpack.c.l.b16 %v681
    %v686 = vunpack.c.l.b16 %v682
    %v687 = vpack.c.b16 %v686, %v685
    %v690 = vsel %vm525, %v680, 0
    %692 = vmatpush.bf16.msra.mxu0 0
    %693 = vmatpush.bf16.msra.mxu0 0
    %694 = vmatpush.bf16.msra.mxu0 0
    %695 = vmatpush.bf16.msra.mxu0 0
    %696 = vmatpush.bf16.msra.mxu0 0
    %697 = vmatpush.bf16.msra.mxu0 0
    %698 = vmatpush.bf16.msra.mxu0 0
    %699 = vmatpush.bf16.msra.mxu0 %v687
    %700 = vmatmul.bf16.gmra.mxu0 %v690
    %v701 = vpop.f32.mrf.mxu0
    %v702 = vadd.f32 0.0, %v701
    %v703 = vpop.f32.mrf.mxu0
    %v704 = vadd.f32 0.0, %v703
    %705 = vdwg.mxu0
    %v706 = vadd.f32 %v678, %v702
    %v707 = vadd.f32 %v679, %v704
    %708 = vst.msk [vmem:[#allocation7] sm:$0xff] %vm598, %v706
    %709 = vst.msk [vmem:[#allocation7 + $0x8] sm:$0xff] %vm598, %v707
    %710 = vst.msk [vmem:[#allocation5] sm:$0xff] %vm601, %v642
    %711 = vst.msk [vmem:[#allocation5 + $0x8] sm:$0xff] %vm601, %v643
    // Predicated region
    $region194: #{tpu_custom_call.1} parent=1 // pred_check
      %p712 = pneg %p400
    $region195: #{tpu_custom_call.1} parent=1 // pred_check_branch
      %714 = sbr.rel (%p712) target = $region197
    $region196: #{tpu_custom_call.1} parent=1 // pred_region
      %v715 = vld [vmem:[#allocation9] sm:$0xff]
      %v716 = vld [vmem:[#allocation9 + $0x8] sm:$0xff]
      %v717 = vld [vmem:[#allocation6] sm:$0xff]
      %v718 = vld [vmem:[#allocation6 + $0x8] sm:$0xff]
      %v719 = vrcp.pop %v717
      %v720 = vrcp.pop %v718
      %722 = vset.pattern.permute.xlu0 32
      %723 = vperm.xlu0 %722, %v719
      %v724 = vpop.permute.xlu0 %723
      %727 = vset.pattern.permute.xlu0 32
      %728 = vperm.xlu0 %727, %v720
      %v729 = vpop.permute.xlu0 %728
      %v731 = vmul.f32 %v717, %v724
      %v732 = vmul.f32 %v718, %v729
      %vm733 = vcmp.ge.f32.partialorder %v731, 0.0
      %vm734 = vcmp.ge.f32.partialorder %v732, 0.0
      %v735 = vmul.f32 %v731, 0.01
      %v736 = vmul.f32 %v732, 0.01
      %v737 = vsel %vm733, %v731, %v735
      %v738 = vsel %vm734, %v732, %v736
      %v739 = vld [vmem:[%s23] sm:$0xff]
      %v740 = vld [vmem:[%s23 + $0x8] sm:$0xff]
      %v741 = vld [vmem:[%s23 + $0x10] sm:$0xff]
      %v742 = vld [vmem:[%s23 + $0x18] sm:$0xff]
      %v743 = vld [vmem:[#allocation24] sm:$0x1]
      %v745 = vperm.slane %v743, 0
      %v748 = vsel %vm502, %v737, 0
      %v751 = vsel %vm502, %v738, 0
      %753 = vmatpush.msra.mxu0 0.0
      %754 = vmatpush.msra.mxu0 0.0
      %755 = vmatpush.msra.mxu0 0.0
      %756 = vmatpush.msra.mxu0 0.0
      %757 = vmatpush.msra.mxu0 0.0
      %758 = vmatpush.msra.mxu0 0.0
      %759 = vmatpush.msra.mxu0 0.0
      %760 = vmatpush.msra.mxu0 0.0
      %761 = vmatpush.msra.mxu0 0.0
      %762 = vmatpush.msra.mxu0 0.0
      %763 = vmatpush.msra.mxu0 0.0
      %764 = vmatpush.msra.mxu0 0.0
      %765 = vmatpush.msra.mxu0 %v742
      %766 = vmatpush.msra.mxu0 %v741
      %767 = vmatpush.msra.mxu0 %v740
      %768 = vmatpush.msra.mxu0 %v739
      %769 = vmatmul.f32.gmra.mxu0 %v748
      %v770 = vpop.f32.mrf.mxu0
      %v771 = vadd.f32 %v745, %v770
      %772 = vmatmul.f32.gmra.mxu0 %v751
      %v773 = vpop.f32.mrf.mxu0
      %v774 = vadd.f32 %v745, %v773
      %775 = vdwg.mxu0
      %vm776 = vcmp.ge.f32.partialorder %v771, 0.0
      %vm777 = vcmp.ge.f32.partialorder %v774, 0.0
      %v778 = vmul.f32 %v771, 0.01
      %v779 = vmul.f32 %v774, 0.01
      %v780 = vsel %vm776, %v771, %v778
      %v781 = vsel %vm777, %v774, %v779
      %v782 = vld [vmem:[#allocation26] sm:$0xff]
      %v783 = vld [vmem:[#allocation26 + $0x8] sm:$0xff]
      %v784 = vld [vmem:[#allocation26 + $0x10] sm:$0xff]
      %v785 = vld [vmem:[#allocation26 + $0x18] sm:$0xff]
      %v786 = vld [vmem:[%s29] sm:$0x1]
      %v788 = vperm.slane %v786, 0
      %v791 = vsel %vm502, %v780, 0
      %v794 = vsel %vm502, %v781, 0
      %796 = vmatpush.msra.mxu0 0.0
      %797 = vmatpush.msra.mxu0 0.0
      %798 = vmatpush.msra.mxu0 0.0
      %799 = vmatpush.msra.mxu0 0.0
      %800 = vmatpush.msra.mxu0 0.0
      %801 = vmatpush.msra.mxu0 0.0
      %802 = vmatpush.msra.mxu0 0.0
      %803 = vmatpush.msra.mxu0 0.0
      %804 = vmatpush.msra.mxu0 0.0
      %805 = vmatpush.msra.mxu0 0.0
      %806 = vmatpush.msra.mxu0 0.0
      %807 = vmatpush.msra.mxu0 0.0
      %808 = vmatpush.msra.mxu0 %v785
      %809 = vmatpush.msra.mxu0 %v784
      %810 = vmatpush.msra.mxu0 %v783
      %811 = vmatpush.msra.mxu0 %v782
      %812 = vmatmul.f32.gmra.mxu0 %v791
      %v813 = vpop.f32.mrf.mxu0
      %v814 = vadd.f32 %v788, %v813
      %815 = vmatmul.f32.gmra.mxu0 %v794
      %v816 = vpop.f32.mrf.mxu0
      %v817 = vadd.f32 %v788, %v816
      %818 = vdwg.mxu0
      %vm819 = vcmp.ge.f32.partialorder %v814, 0.0
      %vm820 = vcmp.ge.f32.partialorder %v817, 0.0
      %v821 = vmul.f32 %v814, 0.01
      %v822 = vmul.f32 %v817, 0.01
      %v823 = vsel %vm819, %v814, %v821
      %v824 = vsel %vm820, %v817, %v822
      %v825 = vld [vmem:[#allocation27] sm:$0xff]
      %v826 = vld [vmem:[#allocation27 + $0x8] sm:$0xff]
      %v827 = vld [vmem:[#allocation27 + $0x10] sm:$0xff]
      %v828 = vld [vmem:[#allocation27 + $0x18] sm:$0xff]
      %v829 = vld [vmem:[%s33] sm:$0x1]
      %v831 = vperm.slane %v829, 0
      %v834 = vsel %vm502, %v823, 0
      %v837 = vsel %vm502, %v824, 0
      %839 = vmatpush.msra.mxu0 0.0
      %840 = vmatpush.msra.mxu0 0.0
      %841 = vmatpush.msra.mxu0 0.0
      %842 = vmatpush.msra.mxu0 0.0
      %843 = vmatpush.msra.mxu0 0.0
      %844 = vmatpush.msra.mxu0 0.0
      %845 = vmatpush.msra.mxu0 0.0
      %846 = vmatpush.msra.mxu0 0.0
      %847 = vmatpush.msra.mxu0 0.0
      %848 = vmatpush.msra.mxu0 0.0
      %849 = vmatpush.msra.mxu0 0.0
      %850 = vmatpush.msra.mxu0 0.0
      %851 = vmatpush.msra.mxu0 %v828
      %852 = vmatpush.msra.mxu0 %v827
      %853 = vmatpush.msra.mxu0 %v826
      %854 = vmatpush.msra.mxu0 %v825
      %855 = vmatmul.f32.gmra.mxu0 %v834
      %v856 = vpop.f32.mrf.mxu0
      %v857 = vadd.f32 %v831, %v856
      %858 = vmatmul.f32.gmra.mxu0 %v837
      %v859 = vpop.f32.mrf.mxu0
      %v860 = vadd.f32 %v831, %v859
      %861 = vdwg.mxu0
      %vm862 = vcmp.ge.f32.partialorder %v857, 0.0
      %vm863 = vcmp.ge.f32.partialorder %v860, 0.0
      %v864 = vmul.f32 %v857, 0.01
      %v865 = vmul.f32 %v860, 0.01
      %v866 = vsel %vm862, %v857, %v864
      %v867 = vsel %vm863, %v860, %v865
      %v868 = vld [vmem:[#allocation7] sm:$0xff]
      %v869 = vld [vmem:[#allocation7 + $0x8] sm:$0xff]
      %v870 = vrcp.pop %v868
      %v871 = vrcp.pop %v869
      %873 = vset.pattern.permute.xlu0 32
      %874 = vperm.xlu0 %873, %v870
      %v875 = vpop.permute.xlu0 %874
      %878 = vset.pattern.permute.xlu0 32
      %879 = vperm.xlu0 %878, %v871
      %v880 = vpop.permute.xlu0 %879
      %v882 = vmul.f32 %v868, %v875
      %v883 = vmul.f32 %v869, %v880
      %v884 = vld [vmem:[#allocation29] sm:$0xff]
      %v885 = vld [vmem:[#allocation29 + $0x8] sm:$0xff]
      %v886 = vld [vmem:[#allocation29 + $0x10] sm:$0xff]
      %v887 = vld [vmem:[#allocation29 + $0x18] sm:$0xff]
      %v888 = vld [vmem:[#allocation29 + $0x20] sm:$0xff]
      %v889 = vld [vmem:[#allocation29 + $0x28] sm:$0xff]
      %v890 = vld [vmem:[#allocation29 + $0x30] sm:$0xff]
      %v891 = vld [vmem:[#allocation29 + $0x38] sm:$0xff]
      %v892 = vld [vmem:[#allocation30] sm:$0xff]
      %v893 = vld [vmem:[#allocation30 + $0x8] sm:$0xff]
      %v894 = vld [vmem:[#allocation30 + $0x10] sm:$0xff]
      %v895 = vld [vmem:[#allocation30 + $0x18] sm:$0xff]
      %v896 = vld [vmem:[#allocation30 + $0x20] sm:$0xff]
      %v897 = vld [vmem:[#allocation30 + $0x28] sm:$0xff]
      %v898 = vld [vmem:[#allocation30 + $0x30] sm:$0xff]
      %v899 = vld [vmem:[#allocation30 + $0x38] sm:$0xff]
      %v900 = vld [vmem:[#allocation30 + $0x40] sm:$0xff]
      %v901 = vld [vmem:[#allocation30 + $0x48] sm:$0xff]
      %v902 = vld [vmem:[#allocation30 + $0x50] sm:$0xff]
      %v903 = vld [vmem:[#allocation30 + $0x58] sm:$0xff]
      %v904 = vld [vmem:[#allocation30 + $0x60] sm:$0xff]
      %v905 = vld [vmem:[#allocation30 + $0x68] sm:$0xff]
      %v906 = vld [vmem:[#allocation30 + $0x70] sm:$0xff]
      %v907 = vld [vmem:[#allocation30 + $0x78] sm:$0xff]
      %v908 = vld [vmem:[#allocation30 + $0x80] sm:$0xff]
      %v909 = vld [vmem:[#allocation30 + $0x88] sm:$0xff]
      %v910 = vld [vmem:[#allocation30 + $0x90] sm:$0xff]
      %v911 = vld [vmem:[#allocation30 + $0x98] sm:$0xff]
      %v912 = vld [vmem:[#allocation30 + $0xa0] sm:$0xff]
      %v913 = vld [vmem:[#allocation30 + $0xa8] sm:$0xff]
      %v914 = vld [vmem:[#allocation30 + $0xb0] sm:$0xff]
      %v915 = vld [vmem:[#allocation30 + $0xb8] sm:$0xff]
      %v916 = vld [vmem:[#allocation30 + $0xc0] sm:$0xff]
      %v917 = vld [vmem:[#allocation30 + $0xc8] sm:$0xff]
      %v918 = vld [vmem:[#allocation30 + $0xd0] sm:$0xff]
      %v919 = vld [vmem:[#allocation30 + $0xd8] sm:$0xff]
      %v920 = vld [vmem:[#allocation30 + $0xe0] sm:$0xff]
      %v921 = vld [vmem:[#allocation30 + $0xe8] sm:$0xff]
      %v922 = vld [vmem:[#allocation30 + $0xf0] sm:$0xff]
      %v923 = vld [vmem:[#allocation30 + $0xf8] sm:$0xff]
      %924 = vmatpush.msra.mxu0 %v922
      %925 = vmatpush.msra.mxu0 %v920
      %926 = vmatpush.msra.mxu0 %v918
      %927 = vmatpush.msra.mxu0 %v916
      %928 = vmatpush.msra.mxu0 %v914
      %929 = vmatpush.msra.mxu0 %v912
      %930 = vmatpush.msra.mxu0 %v910
      %931 = vmatpush.msra.mxu0 %v908
      %932 = vmatpush.msra.mxu0 %v906
      %933 = vmatpush.msra.mxu0 %v904
      %934 = vmatpush.msra.mxu0 %v902
      %935 = vmatpush.msra.mxu0 %v900
      %936 = vmatpush.msra.mxu0 %v898
      %937 = vmatpush.msra.mxu0 %v896
      %938 = vmatpush.msra.mxu0 %v894
      %939 = vmatpush.msra.mxu0 %v892
      %940 = vmatmul.f32.gmra.mxu0 %v715
      %v941 = vpop.f32.mrf.mxu0
      %v942 = vadd.f32 0.0, %v941
      %943 = vmatmul.f32.gmra.mxu0 %v716
      %v944 = vpop.f32.mrf.mxu0
      %v945 = vadd.f32 0.0, %v944
      %946 = vdwg.mxu0
      %947 = vmatpush.msra.mxu0 %v923
      %948 = vmatpush.msra.mxu0 %v921
      %949 = vmatpush.msra.mxu0 %v919
      %950 = vmatpush.msra.mxu0 %v917
      %951 = vmatpush.msra.mxu0 %v915
      %952 = vmatpush.msra.mxu0 %v913
      %953 = vmatpush.msra.mxu0 %v911
      %954 = vmatpush.msra.mxu0 %v909
      %955 = vmatpush.msra.mxu0 %v907
      %956 = vmatpush.msra.mxu0 %v905
      %957 = vmatpush.msra.mxu0 %v903
      %958 = vmatpush.msra.mxu0 %v901
      %959 = vmatpush.msra.mxu0 %v899
      %960 = vmatpush.msra.mxu0 %v897
      %961 = vmatpush.msra.mxu0 %v895
      %962 = vmatpush.msra.mxu0 %v893
      %963 = vmatmul.f32.gmra.mxu0 %v715
      %v964 = vpop.f32.mrf.mxu0
      %v965 = vadd.f32 0.0, %v964
      %966 = vmatmul.f32.gmra.mxu0 %v716
      %v967 = vpop.f32.mrf.mxu0
      %v968 = vadd.f32 0.0, %v967
      %969 = vdwg.mxu0
      %v971 = vsel %vm502, %v882, 0
      %v974 = vsel %vm502, %v883, 0
      %976 = vmatpush.msra.mxu0 0.0
      %977 = vmatpush.msra.mxu0 0.0
      %978 = vmatpush.msra.mxu0 0.0
      %979 = vmatpush.msra.mxu0 0.0
      %980 = vmatpush.msra.mxu0 0.0
      %981 = vmatpush.msra.mxu0 0.0
      %982 = vmatpush.msra.mxu0 0.0
      %983 = vmatpush.msra.mxu0 0.0
      %984 = vmatpush.msra.mxu0 0.0
      %985 = vmatpush.msra.mxu0 0.0
      %986 = vmatpush.msra.mxu0 0.0
      %987 = vmatpush.msra.mxu0 0.0
      %988 = vmatpush.msra.mxu0 %v890
      %989 = vmatpush.msra.mxu0 %v888
      %990 = vmatpush.msra.mxu0 %v886
      %991 = vmatpush.msra.mxu0 %v884
      %992 = vmatmul.f32.gmra.mxu0 %v971
      %v993 = vpop.f32.mrf.mxu0
      %v994 = vadd.f32 %v942, %v993
      %995 = vmatmul.f32.gmra.mxu0 %v974
      %v996 = vpop.f32.mrf.mxu0
      %v997 = vadd.f32 %v945, %v996
      %998 = vdwg.mxu0
      %999 = vmatpush.msra.mxu0 0.0
      %1000 = vmatpush.msra.mxu0 0.0
      %1001 = vmatpush.msra.mxu0 0.0
      %1002 = vmatpush.msra.mxu0 0.0
      %1003 = vmatpush.msra.mxu0 0.0
      %1004 = vmatpush.msra.mxu0 0.0
      %1005 = vmatpush.msra.mxu0 0.0
      %1006 = vmatpush.msra.mxu0 0.0
      %1007 = vmatpush.msra.mxu0 0.0
      %1008 = vmatpush.msra.mxu0 0.0
      %1009 = vmatpush.msra.mxu0 0.0
      %1010 = vmatpush.msra.mxu0 0.0
      %1011 = vmatpush.msra.mxu0 %v891
      %1012 = vmatpush.msra.mxu0 %v889
      %1013 = vmatpush.msra.mxu0 %v887
      %1014 = vmatpush.msra.mxu0 %v885
      %1015 = vmatmul.f32.gmra.mxu0 %v971
      %v1016 = vpop.f32.mrf.mxu0
      %v1017 = vadd.f32 %v965, %v1016
      %1018 = vmatmul.f32.gmra.mxu0 %v974
      %v1019 = vpop.f32.mrf.mxu0
      %v1020 = vadd.f32 %v968, %v1019
      %1021 = vdwg.mxu0
      %v1022 = vld [vmem:[%s39] sm:$0x3]
      %v1024 = vperm.slane %v1022, 0
      %v1025 = vperm.slane %v1022, 1
      %v1028 = vadd.f32 %v994, %v1024
      %v1029 = vadd.f32 %v1017, %v1025
      %v1030 = vadd.f32 %v997, %v1024
      %v1031 = vadd.f32 %v1020, %v1025
      %vm1032 = vcmp.ge.f32.partialorder %v1028, 0.0
      %vm1033 = vcmp.ge.f32.partialorder %v1029, 0.0
      %vm1034 = vcmp.ge.f32.partialorder %v1030, 0.0
      %vm1035 = vcmp.ge.f32.partialorder %v1031, 0.0
      %v1036 = vmul.f32 %v1028, 0.01
      %v1037 = vmul.f32 %v1029, 0.01
      %v1038 = vmul.f32 %v1030, 0.01
      %v1039 = vmul.f32 %v1031, 0.01
      %v1040 = vsel %vm1032, %v1028, %v1036
      %v1041 = vsel %vm1033, %v1029, %v1037
      %v1042 = vsel %vm1034, %v1030, %v1038
      %v1043 = vsel %vm1035, %v1031, %v1039
      %v1044 = vld [vmem:[#allocation32] sm:$0xff]
      %v1045 = vld [vmem:[#allocation32 + $0x8] sm:$0xff]
      %v1046 = vld [vmem:[#allocation32 + $0x10] sm:$0xff]
      %v1047 = vld [vmem:[#allocation32 + $0x18] sm:$0xff]
      %v1048 = vld [vmem:[#allocation32 + $0x20] sm:$0xff]
      %v1049 = vld [vmem:[#allocation32 + $0x28] sm:$0xff]
      %v1050 = vld [vmem:[#allocation32 + $0x30] sm:$0xff]
      %v1051 = vld [vmem:[#allocation32 + $0x38] sm:$0xff]
      %v1052 = vld [vmem:[#allocation32 + $0x40] sm:$0xff]
      %v1053 = vld [vmem:[#allocation32 + $0x48] sm:$0xff]
      %v1054 = vld [vmem:[#allocation32 + $0x50] sm:$0xff]
      %v1055 = vld [vmem:[#allocation32 + $0x58] sm:$0xff]
      %v1056 = vld [vmem:[#allocation32 + $0x60] sm:$0xff]
      %v1057 = vld [vmem:[#allocation32 + $0x68] sm:$0xff]
      %v1058 = vld [vmem:[#allocation32 + $0x70] sm:$0xff]
      %v1059 = vld [vmem:[#allocation32 + $0x78] sm:$0xff]
      %v1060 = vld [vmem:[#allocation32 + $0x80] sm:$0xff]
      %v1061 = vld [vmem:[#allocation32 + $0x88] sm:$0xff]
      %v1062 = vld [vmem:[#allocation32 + $0x90] sm:$0xff]
      %v1063 = vld [vmem:[#allocation32 + $0x98] sm:$0xff]
      %v1064 = vld [vmem:[#allocation32 + $0xa0] sm:$0xff]
      %v1065 = vld [vmem:[#allocation32 + $0xa8] sm:$0xff]
      %v1066 = vld [vmem:[#allocation32 + $0xb0] sm:$0xff]
      %v1067 = vld [vmem:[#allocation32 + $0xb8] sm:$0xff]
      %v1068 = vld [vmem:[#allocation32 + $0xc0] sm:$0xff]
      %v1069 = vld [vmem:[#allocation32 + $0xc8] sm:$0xff]
      %v1070 = vld [vmem:[#allocation32 + $0xd0] sm:$0xff]
      %v1071 = vld [vmem:[#allocation32 + $0xd8] sm:$0xff]
      %v1072 = vld [vmem:[#allocation32 + $0xe0] sm:$0xff]
      %v1073 = vld [vmem:[#allocation32 + $0xe8] sm:$0xff]
      %v1074 = vld [vmem:[#allocation32 + $0xf0] sm:$0xff]
      %v1075 = vld [vmem:[#allocation32 + $0xf8] sm:$0xff]
      %v1076 = vld [vmem:[#allocation32 + $0x100] sm:$0xff]
      %v1077 = vld [vmem:[#allocation32 + $0x108] sm:$0xff]
      %v1078 = vld [vmem:[#allocation32 + $0x110] sm:$0xff]
      %v1079 = vld [vmem:[#allocation32 + $0x118] sm:$0xff]
      %v1080 = vld [vmem:[#allocation32 + $0x120] sm:$0xff]
      %v1081 = vld [vmem:[#allocation32 + $0x128] sm:$0xff]
      %v1082 = vld [vmem:[#allocation32 + $0x130] sm:$0xff]
      %v1083 = vld [vmem:[#allocation32 + $0x138] sm:$0xff]
      %v1084 = vld [vmem:[#allocation32 + $0x140] sm:$0xff]
      %v1085 = vld [vmem:[#allocation32 + $0x148] sm:$0xff]
      %v1086 = vld [vmem:[#allocation32 + $0x150] sm:$0xff]
      %v1087 = vld [vmem:[#allocation32 + $0x158] sm:$0xff]
      %v1088 = vld [vmem:[#allocation32 + $0x160] sm:$0xff]
      %v1089 = vld [vmem:[#allocation32 + $0x168] sm:$0xff]
      %v1090 = vld [vmem:[#allocation32 + $0x170] sm:$0xff]
      %v1091 = vld [vmem:[#allocation32 + $0x178] sm:$0xff]
      %v1092 = vld [vmem:[#allocation32 + $0x180] sm:$0xff]
      %v1093 = vld [vmem:[#allocation32 + $0x188] sm:$0xff]
      %v1094 = vld [vmem:[#allocation32 + $0x190] sm:$0xff]
      %v1095 = vld [vmem:[#allocation32 + $0x198] sm:$0xff]
      %v1096 = vld [vmem:[#allocation32 + $0x1a0] sm:$0xff]
      %v1097 = vld [vmem:[#allocation32 + $0x1a8] sm:$0xff]
      %v1098 = vld [vmem:[#allocation32 + $0x1b0] sm:$0xff]
      %v1099 = vld [vmem:[#allocation32 + $0x1b8] sm:$0xff]
      %v1100 = vld [vmem:[#allocation32 + $0x1c0] sm:$0xff]
      %v1101 = vld [vmem:[#allocation32 + $0x1c8] sm:$0xff]
      %v1102 = vld [vmem:[#allocation32 + $0x1d0] sm:$0xff]
      %v1103 = vld [vmem:[#allocation32 + $0x1d8] sm:$0xff]
      %v1104 = vld [vmem:[#allocation32 + $0x1e0] sm:$0xff]
      %v1105 = vld [vmem:[#allocation32 + $0x1e8] sm:$0xff]
      %v1106 = vld [vmem:[#allocation32 + $0x1f0] sm:$0xff]
      %v1107 = vld [vmem:[#allocation32 + $0x1f8] sm:$0xff]
      %v1108 = vld [vmem:[%s43] sm:$0x3]
      %v1110 = vperm.slane %v1108, 0
      %v1111 = vperm.slane %v1108, 1
      %1114 = vmatpush.msra.mxu0 %v1074
      %1115 = vmatpush.msra.mxu0 %v1072
      %1116 = vmatpush.msra.mxu0 %v1070
      %1117 = vmatpush.msra.mxu0 %v1068
      %1118 = vmatpush.msra.mxu0 %v1066
      %1119 = vmatpush.msra.mxu0 %v1064
      %1120 = vmatpush.msra.mxu0 %v1062
      %1121 = vmatpush.msra.mxu0 %v1060
      %1122 = vmatpush.msra.mxu0 %v1058
      %1123 = vmatpush.msra.mxu0 %v1056
      %1124 = vmatpush.msra.mxu0 %v1054
      %1125 = vmatpush.msra.mxu0 %v1052
      %1126 = vmatpush.msra.mxu0 %v1050
      %1127 = vmatpush.msra.mxu0 %v1048
      %1128 = vmatpush.msra.mxu0 %v1046
      %1129 = vmatpush.msra.mxu0 %v1044
      %1130 = vmatmul.f32.gmra.mxu0 %v1040
      %v1131 = vpop.f32.mrf.mxu0
      %v1132 = vadd.f32 %v1110, %v1131
      %1133 = vmatmul.f32.gmra.mxu0 %v1042
      %v1134 = vpop.f32.mrf.mxu0
      %v1135 = vadd.f32 %v1110, %v1134
      %1136 = vdwg.mxu0
      %1137 = vmatpush.msra.mxu0 %v1106
      %1138 = vmatpush.msra.mxu0 %v1104
      %1139 = vmatpush.msra.mxu0 %v1102
      %1140 = vmatpush.msra.mxu0 %v1100
      %1141 = vmatpush.msra.mxu0 %v1098
      %1142 = vmatpush.msra.mxu0 %v1096
      %1143 = vmatpush.msra.mxu0 %v1094
      %1144 = vmatpush.msra.mxu0 %v1092
      %1145 = vmatpush.msra.mxu0 %v1090
      %1146 = vmatpush.msra.mxu0 %v1088
      %1147 = vmatpush.msra.mxu0 %v1086
      %1148 = vmatpush.msra.mxu0 %v1084
      %1149 = vmatpush.msra.mxu0 %v1082
      %1150 = vmatpush.msra.mxu0 %v1080
      %1151 = vmatpush.msra.mxu0 %v1078
      %1152 = vmatpush.msra.mxu0 %v1076
      %1153 = vmatmul.f32.gmra.mxu0 %v1041
      %v1154 = vpop.f32.mrf.mxu0
      %v1155 = vadd.f32 %v1132, %v1154
      %1156 = vmatmul.f32.gmra.mxu0 %v1043
      %v1157 = vpop.f32.mrf.mxu0
      %v1158 = vadd.f32 %v1135, %v1157
      %1159 = vdwg.mxu0
      %1160 = vmatpush.msra.mxu0 %v1075
      %1161 = vmatpush.msra.mxu0 %v1073
      %1162 = vmatpush.msra.mxu0 %v1071
      %1163 = vmatpush.msra.mxu0 %v1069
      %1164 = vmatpush.msra.mxu0 %v1067
      %1165 = vmatpush.msra.mxu0 %v1065
      %1166 = vmatpush.msra.mxu0 %v1063
      %1167 = vmatpush.msra.mxu0 %v1061
      %1168 = vmatpush.msra.mxu0 %v1059
      %1169 = vmatpush.msra.mxu0 %v1057
      %1170 = vmatpush.msra.mxu0 %v1055
      %1171 = vmatpush.msra.mxu0 %v1053
      %1172 = vmatpush.msra.mxu0 %v1051
      %1173 = vmatpush.msra.mxu0 %v1049
      %1174 = vmatpush.msra.mxu0 %v1047
      %1175 = vmatpush.msra.mxu0 %v1045
      %1176 = vmatmul.f32.gmra.mxu0 %v1040
      %v1177 = vpop.f32.mrf.mxu0
      %v1178 = vadd.f32 %v1111, %v1177
      %1179 = vmatmul.f32.gmra.mxu0 %v1042
      %v1180 = vpop.f32.mrf.mxu0
      %v1181 = vadd.f32 %v1111, %v1180
      %1182 = vdwg.mxu0
      %1183 = vmatpush.msra.mxu0 %v1107
      %1184 = vmatpush.msra.mxu0 %v1105
      %1185 = vmatpush.msra.mxu0 %v1103
      %1186 = vmatpush.msra.mxu0 %v1101
      %1187 = vmatpush.msra.mxu0 %v1099
      %1188 = vmatpush.msra.mxu0 %v1097
      %1189 = vmatpush.msra.mxu0 %v1095
      %1190 = vmatpush.msra.mxu0 %v1093
      %1191 = vmatpush.msra.mxu0 %v1091
      %1192 = vmatpush.msra.mxu0 %v1089
      %1193 = vmatpush.msra.mxu0 %v1087
      %1194 = vmatpush.msra.mxu0 %v1085
      %1195 = vmatpush.msra.mxu0 %v1083
      %1196 = vmatpush.msra.mxu0 %v1081
      %1197 = vmatpush.msra.mxu0 %v1079
      %1198 = vmatpush.msra.mxu0 %v1077
      %1199 = vmatmul.f32.gmra.mxu0 %v1041
      %v1200 = vpop.f32.mrf.mxu0
      %v1201 = vadd.f32 %v1178, %v1200
      %1202 = vmatmul.f32.gmra.mxu0 %v1043
      %v1203 = vpop.f32.mrf.mxu0
      %v1204 = vadd.f32 %v1181, %v1203
      %1205 = vdwg.mxu0
      %vm1206 = vcmp.ge.f32.partialorder %v1155, 0.0
      %vm1207 = vcmp.ge.f32.partialorder %v1201, 0.0
      %vm1208 = vcmp.ge.f32.partialorder %v1158, 0.0
      %vm1209 = vcmp.ge.f32.partialorder %v1204, 0.0
      %v1210 = vmul.f32 %v1155, 0.01
      %v1211 = vmul.f32 %v1201, 0.01
      %v1212 = vmul.f32 %v1158, 0.01
      %v1213 = vmul.f32 %v1204, 0.01
      %v1214 = vsel %vm1206, %v1155, %v1210
      %v1215 = vsel %vm1207, %v1201, %v1211
      %v1216 = vsel %vm1208, %v1158, %v1212
      %v1217 = vsel %vm1209, %v1204, %v1213
      %v1218 = vld [vmem:[#allocation33] sm:$0xff]
      %v1219 = vld [vmem:[#allocation33 + $0x8] sm:$0xff]
      %v1220 = vld [vmem:[#allocation33 + $0x10] sm:$0xff]
      %v1221 = vld [vmem:[#allocation33 + $0x18] sm:$0xff]
      %v1222 = vld [vmem:[#allocation33 + $0x20] sm:$0xff]
      %v1223 = vld [vmem:[#allocation33 + $0x28] sm:$0xff]
      %v1224 = vld [vmem:[#allocation33 + $0x30] sm:$0xff]
      %v1225 = vld [vmem:[#allocation33 + $0x38] sm:$0xff]
      %v1226 = vld [vmem:[#allocation33 + $0x40] sm:$0xff]
      %v1227 = vld [vmem:[#allocation33 + $0x48] sm:$0xff]
      %v1228 = vld [vmem:[#allocation33 + $0x50] sm:$0xff]
      %v1229 = vld [vmem:[#allocation33 + $0x58] sm:$0xff]
      %v1230 = vld [vmem:[#allocation33 + $0x60] sm:$0xff]
      %v1231 = vld [vmem:[#allocation33 + $0x68] sm:$0xff]
      %v1232 = vld [vmem:[#allocation33 + $0x70] sm:$0xff]
      %v1233 = vld [vmem:[#allocation33 + $0x78] sm:$0xff]
      %v1234 = vld [vmem:[#allocation33 + $0x80] sm:$0xff]
      %v1235 = vld [vmem:[#allocation33 + $0x88] sm:$0xff]
      %v1236 = vld [vmem:[#allocation33 + $0x90] sm:$0xff]
      %v1237 = vld [vmem:[#allocation33 + $0x98] sm:$0xff]
      %v1238 = vld [vmem:[#allocation33 + $0xa0] sm:$0xff]
      %v1239 = vld [vmem:[#allocation33 + $0xa8] sm:$0xff]
      %v1240 = vld [vmem:[#allocation33 + $0xb0] sm:$0xff]
      %v1241 = vld [vmem:[#allocation33 + $0xb8] sm:$0xff]
      %v1242 = vld [vmem:[#allocation33 + $0xc0] sm:$0xff]
      %v1243 = vld [vmem:[#allocation33 + $0xc8] sm:$0xff]
      %v1244 = vld [vmem:[#allocation33 + $0xd0] sm:$0xff]
      %v1245 = vld [vmem:[#allocation33 + $0xd8] sm:$0xff]
      %v1246 = vld [vmem:[#allocation33 + $0xe0] sm:$0xff]
      %v1247 = vld [vmem:[#allocation33 + $0xe8] sm:$0xff]
      %v1248 = vld [vmem:[#allocation33 + $0xf0] sm:$0xff]
      %v1249 = vld [vmem:[#allocation33 + $0xf8] sm:$0xff]
      %v1250 = vld [vmem:[%s47] sm:$0x1]
      %v1252 = vperm.slane %v1250, 0
      %1254 = vmatpush.msra.mxu0 %v1233
      %1255 = vmatpush.msra.mxu0 %v1232
      %1256 = vmatpush.msra.mxu0 %v1231
      %1257 = vmatpush.msra.mxu0 %v1230
      %1258 = vmatpush.msra.mxu0 %v1229
      %1259 = vmatpush.msra.mxu0 %v1228
      %1260 = vmatpush.msra.mxu0 %v1227
      %1261 = vmatpush.msra.mxu0 %v1226
      %1262 = vmatpush.msra.mxu0 %v1225
      %1263 = vmatpush.msra.mxu0 %v1224
      %1264 = vmatpush.msra.mxu0 %v1223
      %1265 = vmatpush.msra.mxu0 %v1222
      %1266 = vmatpush.msra.mxu0 %v1221
      %1267 = vmatpush.msra.mxu0 %v1220
      %1268 = vmatpush.msra.mxu0 %v1219
      %1269 = vmatpush.msra.mxu0 %v1218
      %1270 = vmatmul.f32.gmra.mxu0 %v1214
      %v1271 = vpop.f32.mrf.mxu0
      %v1272 = vadd.f32 %v1252, %v1271
      %1273 = vmatmul.f32.gmra.mxu0 %v1216
      %v1274 = vpop.f32.mrf.mxu0
      %v1275 = vadd.f32 %v1252, %v1274
      %1276 = vdwg.mxu0
      %1277 = vmatpush.msra.mxu0 %v1249
      %1278 = vmatpush.msra.mxu0 %v1248
      %1279 = vmatpush.msra.mxu0 %v1247
      %1280 = vmatpush.msra.mxu0 %v1246
      %1281 = vmatpush.msra.mxu0 %v1245
      %1282 = vmatpush.msra.mxu0 %v1244
      %1283 = vmatpush.msra.mxu0 %v1243
      %1284 = vmatpush.msra.mxu0 %v1242
      %1285 = vmatpush.msra.mxu0 %v1241
      %1286 = vmatpush.msra.mxu0 %v1240
      %1287 = vmatpush.msra.mxu0 %v1239
      %1288 = vmatpush.msra.mxu0 %v1238
      %1289 = vmatpush.msra.mxu0 %v1237
      %1290 = vmatpush.msra.mxu0 %v1236
      %1291 = vmatpush.msra.mxu0 %v1235
      %1292 = vmatpush.msra.mxu0 %v1234
      %1293 = vmatmul.f32.gmra.mxu0 %v1215
      %v1294 = vpop.f32.mrf.mxu0
      %v1295 = vadd.f32 %v1272, %v1294
      %1296 = vmatmul.f32.gmra.mxu0 %v1217
      %v1297 = vpop.f32.mrf.mxu0
      %v1298 = vadd.f32 %v1275, %v1297
      %1299 = vdwg.mxu0
      %1300 = vst [vmem:[#allocation39] sm:$0xff] %v1295
      %1301 = vst [vmem:[#allocation39 + $0x8] sm:$0xff] %v1298
      %v1302 = vld [vmem:[#allocation35] sm:$0xff]
      %v1303 = vld [vmem:[#allocation35 + $0x8] sm:$0xff]
      %v1304 = vld [vmem:[#allocation35 + $0x10] sm:$0xff]
      %v1305 = vld [vmem:[#allocation35 + $0x18] sm:$0xff]
      %v1306 = vld [vmem:[#allocation35 + $0x20] sm:$0xff]
      %v1307 = vld [vmem:[#allocation35 + $0x28] sm:$0xff]
      %v1308 = vld [vmem:[#allocation35 + $0x30] sm:$0xff]
      %v1309 = vld [vmem:[#allocation35 + $0x38] sm:$0xff]
      %v1310 = vld [vmem:[#allocation36] sm:$0xff]
      %v1311 = vld [vmem:[#allocation36 + $0x8] sm:$0xff]
      %v1312 = vld [vmem:[#allocation36 + $0x10] sm:$0xff]
      %v1313 = vld [vmem:[#allocation36 + $0x18] sm:$0xff]
      %v1314 = vld [vmem:[#allocation36 + $0x20] sm:$0xff]
      %v1315 = vld [vmem:[#allocation36 + $0x28] sm:$0xff]
      %v1316 = vld [vmem:[#allocation36 + $0x30] sm:$0xff]
      %v1317 = vld [vmem:[#allocation36 + $0x38] sm:$0xff]
      %v1318 = vld [vmem:[#allocation36 + $0x40] sm:$0xff]
      %v1319 = vld [vmem:[#allocation36 + $0x48] sm:$0xff]
      %v1320 = vld [vmem:[#allocation36 + $0x50] sm:$0xff]
      %v1321 = vld [vmem:[#allocation36 + $0x58] sm:$0xff]
      %v1322 = vld [vmem:[#allocation36 + $0x60] sm:$0xff]
      %v1323 = vld [vmem:[#allocation36 + $0x68] sm:$0xff]
      %v1324 = vld [vmem:[#allocation36 + $0x70] sm:$0xff]
      %v1325 = vld [vmem:[#allocation36 + $0x78] sm:$0xff]
      %v1326 = vld [vmem:[#allocation36 + $0x80] sm:$0xff]
      %v1327 = vld [vmem:[#allocation36 + $0x88] sm:$0xff]
      %v1328 = vld [vmem:[#allocation36 + $0x90] sm:$0xff]
      %v1329 = vld [vmem:[#allocation36 + $0x98] sm:$0xff]
      %v1330 = vld [vmem:[#allocation36 + $0xa0] sm:$0xff]
      %v1331 = vld [vmem:[#allocation36 + $0xa8] sm:$0xff]
      %v1332 = vld [vmem:[#allocation36 + $0xb0] sm:$0xff]
      %v1333 = vld [vmem:[#allocation36 + $0xb8] sm:$0xff]
      %v1334 = vld [vmem:[#allocation36 + $0xc0] sm:$0xff]
      %v1335 = vld [vmem:[#allocation36 + $0xc8] sm:$0xff]
      %v1336 = vld [vmem:[#allocation36 + $0xd0] sm:$0xff]
      %v1337 = vld [vmem:[#allocation36 + $0xd8] sm:$0xff]
      %v1338 = vld [vmem:[#allocation36 + $0xe0] sm:$0xff]
      %v1339 = vld [vmem:[#allocation36 + $0xe8] sm:$0xff]
      %v1340 = vld [vmem:[#allocation36 + $0xf0] sm:$0xff]
      %v1341 = vld [vmem:[#allocation36 + $0xf8] sm:$0xff]
      %1342 = vmatpush.msra.mxu0 %v1340
      %1343 = vmatpush.msra.mxu0 %v1338
      %1344 = vmatpush.msra.mxu0 %v1336
      %1345 = vmatpush.msra.mxu0 %v1334
      %1346 = vmatpush.msra.mxu0 %v1332
      %1347 = vmatpush.msra.mxu0 %v1330
      %1348 = vmatpush.msra.mxu0 %v1328
      %1349 = vmatpush.msra.mxu0 %v1326
      %1350 = vmatpush.msra.mxu0 %v1324
      %1351 = vmatpush.msra.mxu0 %v1322
      %1352 = vmatpush.msra.mxu0 %v1320
      %1353 = vmatpush.msra.mxu0 %v1318
      %1354 = vmatpush.msra.mxu0 %v1316
      %1355 = vmatpush.msra.mxu0 %v1314
      %1356 = vmatpush.msra.mxu0 %v1312
      %1357 = vmatpush.msra.mxu0 %v1310
      %1358 = vmatmul.f32.gmra.mxu0 %v715
      %v1359 = vpop.f32.mrf.mxu0
      %v1360 = vadd.f32 0.0, %v1359
      %1361 = vmatmul.f32.gmra.mxu0 %v716
      %v1362 = vpop.f32.mrf.mxu0
      %v1363 = vadd.f32 0.0, %v1362
      %1364 = vdwg.mxu0
      %1365 = vmatpush.msra.mxu0 %v1341
      %1366 = vmatpush.msra.mxu0 %v1339
      %1367 = vmatpush.msra.mxu0 %v1337
      %1368 = vmatpush.msra.mxu0 %v1335
      %1369 = vmatpush.msra.mxu0 %v1333
      %1370 = vmatpush.msra.mxu0 %v1331
      %1371 = vmatpush.msra.mxu0 %v1329
      %1372 = vmatpush.msra.mxu0 %v1327
      %1373 = vmatpush.msra.mxu0 %v1325
      %1374 = vmatpush.msra.mxu0 %v1323
      %1375 = vmatpush.msra.mxu0 %v1321
      %1376 = vmatpush.msra.mxu0 %v1319
      %1377 = vmatpush.msra.mxu0 %v1317
      %1378 = vmatpush.msra.mxu0 %v1315
      %1379 = vmatpush.msra.mxu0 %v1313
      %1380 = vmatpush.msra.mxu0 %v1311
      %1381 = vmatmul.f32.gmra.mxu0 %v715
      %v1382 = vpop.f32.mrf.mxu0
      %v1383 = vadd.f32 0.0, %v1382
      %1384 = vmatmul.f32.gmra.mxu0 %v716
      %v1385 = vpop.f32.mrf.mxu0
      %v1386 = vadd.f32 0.0, %v1385
      %1387 = vdwg.mxu0
      %v1389 = vsel %vm502, %v866, 0
      %v1392 = vsel %vm502, %v867, 0
      %1394 = vmatpush.msra.mxu0 0.0
      %1395 = vmatpush.msra.mxu0 0.0
      %1396 = vmatpush.msra.mxu0 0.0
      %1397 = vmatpush.msra.mxu0 0.0
      %1398 = vmatpush.msra.mxu0 0.0
      %1399 = vmatpush.msra.mxu0 0.0
      %1400 = vmatpush.msra.mxu0 0.0
      %1401 = vmatpush.msra.mxu0 0.0
      %1402 = vmatpush.msra.mxu0 0.0
      %1403 = vmatpush.msra.mxu0 0.0
      %1404 = vmatpush.msra.mxu0 0.0
      %1405 = vmatpush.msra.mxu0 0.0
      %1406 = vmatpush.msra.mxu0 %v1308
      %1407 = vmatpush.msra.mxu0 %v1306
      %1408 = vmatpush.msra.mxu0 %v1304
      %1409 = vmatpush.msra.mxu0 %v1302
      %1410 = vmatmul.f32.gmra.mxu0 %v1389
      %v1411 = vpop.f32.mrf.mxu0
      %v1412 = vadd.f32 %v1360, %v1411
      %1413 = vmatmul.f32.gmra.mxu0 %v1392
      %v1414 = vpop.f32.mrf.mxu0
      %v1415 = vadd.f32 %v1363, %v1414
      %1416 = vdwg.mxu0
      %1417 = vmatpush.msra.mxu0 0.0
      %1418 = vmatpush.msra.mxu0 0.0
      %1419 = vmatpush.msra.mxu0 0.0
      %1420 = vmatpush.msra.mxu0 0.0
      %1421 = vmatpush.msra.mxu0 0.0
      %1422 = vmatpush.msra.mxu0 0.0
      %1423 = vmatpush.msra.mxu0 0.0
      %1424 = vmatpush.msra.mxu0 0.0
      %1425 = vmatpush.msra.mxu0 0.0
      %1426 = vmatpush.msra.mxu0 0.0
      %1427 = vmatpush.msra.mxu0 0.0
      %1428 = vmatpush.msra.mxu0 0.0
      %1429 = vmatpush.msra.mxu0 %v1309
      %1430 = vmatpush.msra.mxu0 %v1307
      %1431 = vmatpush.msra.mxu0 %v1305
      %1432 = vmatpush.msra.mxu0 %v1303
      %1433 = vmatmul.f32.gmra.mxu0 %v1389
      %v1434 = vpop.f32.mrf.mxu0
      %v1435 = vadd.f32 %v1383, %v1434
      %1436 = vmatmul.f32.gmra.mxu0 %v1392
      %v1437 = vpop.f32.mrf.mxu0
      %v1438 = vadd.f32 %v1386, %v1437
      %1439 = vdwg.mxu0
      %v1440 = vld [vmem:[%s53] sm:$0x3]
      %v1442 = vperm.slane %v1440, 0
      %v1443 = vperm.slane %v1440, 1
      %v1446 = vadd.f32 %v1412, %v1442
      %v1447 = vadd.f32 %v1435, %v1443
      %v1448 = vadd.f32 %v1415, %v1442
      %v1449 = vadd.f32 %v1438, %v1443
      %vm1450 = vcmp.ge.f32.partialorder %v1446, 0.0
      %vm1451 = vcmp.ge.f32.partialorder %v1447, 0.0
      %vm1452 = vcmp.ge.f32.partialorder %v1448, 0.0
      %vm1453 = vcmp.ge.f32.partialorder %v1449, 0.0
      %v1454 = vmul.f32 %v1446, 0.01
      %v1455 = vmul.f32 %v1447, 0.01
      %v1456 = vmul.f32 %v1448, 0.01
      %v1457 = vmul.f32 %v1449, 0.01
      %v1458 = vsel %vm1450, %v1446, %v1454
      %v1459 = vsel %vm1451, %v1447, %v1455
      %v1460 = vsel %vm1452, %v1448, %v1456
      %v1461 = vsel %vm1453, %v1449, %v1457
      %v1462 = vld [vmem:[%s55] sm:$0xff]
      %v1463 = vld [vmem:[%s55 + $0x8] sm:$0xff]
      %1464 = vmatpush.xpose.msra.mxu0 0.0
      %1465 = vmatpush.xpose.msra.mxu0 0.0
      %1466 = vmatpush.xpose.msra.mxu0 0.0
      %1467 = vmatpush.xpose.msra.mxu0 0.0
      %1468 = vmatpush.xpose.msra.mxu0 0.0
      %1469 = vmatpush.xpose.msra.mxu0 0.0
      %1470 = vmatpush.xpose.msra.mxu0 0.0
      %1471 = vmatpush.xpose.msra.mxu0 0.0
      %1472 = vmatpush.xpose.msra.mxu0 0.0
      %1473 = vmatpush.xpose.msra.mxu0 0.0
      %1474 = vmatpush.xpose.msra.mxu0 0.0
      %1475 = vmatpush.xpose.msra.mxu0 0.0
      %1476 = vmatpush.xpose.msra.mxu0 0.0
      %1477 = vmatpush.xpose.msra.mxu0 0.0
      %1478 = vmatpush.xpose.msra.mxu0 %v1460
      %1479 = vmatpush.xpose.msra.mxu0 %v1458
      %1480 = vmatmul.f32.gmra.mxu0 %v1462
      %v1481 = vpop.f32.mrf.mxu0
      %v1482 = vadd.f32 0.0, %v1481
      %1483 = vdwg.mxu0
      %1484 = vmatpush.xpose.msra.mxu0 0.0
      %1485 = vmatpush.xpose.msra.mxu0 0.0
      %1486 = vmatpush.xpose.msra.mxu0 0.0
      %1487 = vmatpush.xpose.msra.mxu0 0.0
      %1488 = vmatpush.xpose.msra.mxu0 0.0
      %1489 = vmatpush.xpose.msra.mxu0 0.0
      %1490 = vmatpush.xpose.msra.mxu0 0.0
      %1491 = vmatpush.xpose.msra.mxu0 0.0
      %1492 = vmatpush.xpose.msra.mxu0 0.0
      %1493 = vmatpush.xpose.msra.mxu0 0.0
      %1494 = vmatpush.xpose.msra.mxu0 0.0
      %1495 = vmatpush.xpose.msra.mxu0 0.0
      %1496 = vmatpush.xpose.msra.mxu0 0.0
      %1497 = vmatpush.xpose.msra.mxu0 0.0
      %1498 = vmatpush.xpose.msra.mxu0 %v1461
      %1499 = vmatpush.xpose.msra.mxu0 %v1459
      %1500 = vmatmul.f32.gmra.mxu0 %v1463
      %v1501 = vpop.f32.mrf.mxu0
      %v1502 = vadd.f32 %v1482, %v1501
      %1503 = vdwg.mxu0
      %v1504 = vld [vmem:[#allocation8] sm:$0x1]
      %1506 = vset.pattern.permute.xlu0 0
      %1507 = vperm.xlu0 %1506, %v1504
      %v1508 = vpop.permute.xlu0 %1507
      %v1510 = vperm.slane %v1508, 0
      %v1511 = vadd.f32 %v1502, %v1510
      %v1512 = vmax.f32 %v1511, 0.0
      %v1513 = vand.u32 2147483647, %v1511
      %v1514 = vsub.f32 0.0, %v1513
      %v1515 = vmul.f32 %v1514, 1.442695
      %v1516 = vpow.pop %v1515
      %v1517 = vadd.f32 %v1516, 1.0
      %v1518 = vlog2.pop %v1517
      %v1519 = vmul.f32 %v1518, 0.6931472
      %v1520 = vmul.f32 -0.5, %v1516
      %v1521 = vadd.f32 %v1520, 1.0
      %v1522 = vmul.f32 %v1521, %v1516
      %v1523 = vand.u32 2147483647, %v1516
      %vm1524 = vcmp.lt.f32.partialorder %v1523, 0.0004427343
      %v1525 = vsel %vm1524, %v1522, %v1519
      %v1526 = vadd.f32 %v1512, %v1525
      %vm1527 = vcmask 122880
      %1528 = vst.msk [vmem:[#allocation38] sm:$0x1] %vm1527, %v1526
    $region197: #{tpu_custom_call.1} parent=1 // pred_fallthru
      _
    // Predicated region
    $region198: #{tpu_custom_call.1} parent=1 // pred_check
      _
    $region199: #{tpu_custom_call.1} parent=1 // pred_check_branch
      %1530 = sbr.rel (0) target = $region201
    $region200: #{tpu_custom_call.1} parent=1 // pred_region
      %1532 = vsyncadd [#allocation11], 0
      %s1534 = sshll.u32 [#allocation38], 4
      %s1535 = int_to_ptr.vmem [resolvable:$true] %s1534
      %s1536 = sshll.u32 %s59, 4
      %s1537 = int_to_ptr.hbm [resolvable:$true] %s1536
      %1539 = dma.vmem_to_hbm [thread:$0]  %s1535, 16, %s1537, [#allocation11]
    $region201: #{tpu_custom_call.1} parent=1 // pred_fallthru
      _
    // Predicated region
    $region202: #{tpu_custom_call.1} parent=1 // pred_check
      _
    $region203: #{tpu_custom_call.1} parent=1 // pred_check_branch
      %1541 = sbr.rel (0) target = $region205
    $region204: #{tpu_custom_call.1} parent=1 // pred_region
      %1543 = vsyncadd [#allocation40], 0
      %s1544 = sshll.u32 [#allocation39], 4
      %s1545 = int_to_ptr.vmem [resolvable:$true] %s1544
      %s1546 = sshll.u32 %s61, 4
      %s1547 = int_to_ptr.hbm [resolvable:$true] %s1546
      %1552 = dma.vmem_to_hbm [thread:$0]  %s1545, 256, %s1547, [#allocation40], 128, 128, 8
    $region205: #{tpu_custom_call.1} parent=1 // pred_fallthru
      _
    // Predicated region
    $region206: #{tpu_custom_call.1} parent=1 // pred_check
      _
    $region207: #{tpu_custom_call.1} parent=1 // pred_check_branch
      %1554 = sbr.rel (0) target = $region209
    $region208: #{tpu_custom_call.1} parent=1 // pred_region
      %1556 = dma.done [#allocation11], 16
    $region209: #{tpu_custom_call.1} parent=1 // pred_fallthru
      _
    // Predicated region
    $region210: #{tpu_custom_call.1} parent=1 // pred_check
      _
    $region211: #{tpu_custom_call.1} parent=1 // pred_check_branch
      %1558 = sbr.rel (0) target = $region213
    $region212: #{tpu_custom_call.1} parent=1 // pred_region
      %1560 = dma.done [#allocation40], 256
    $region213: #{tpu_custom_call.1} parent=1 // pred_fallthru
      _
    %1561 = vsyncpa [#allocation10], 1
    %1562 = vsyncpa [#allocation13], 1
    %1563 = vsyncpa [#allocation16], 1
    %1564 = vsyncpa [#allocation19], 1
    %1565 = vsyncpa [#allocation22], 1
    %1566 = vsyncpa [#allocation25], 1
    %1567 = vsyncpa [#allocation28], 1
    %1568 = vsyncpa [#allocation31], 1
    %1569 = vsyncpa [#allocation34], 1
    %1570 = vsyncpa [#allocation37], 1
    %1571 = vsyncpa [#allocation11], 1
    %1572 = vsyncpa [#allocation40], 1

</llo_original>
